<compile_context>
chip_gen: v7x
topology: tpu7x:2x2x1
jax: 0.10.0
libtpu: 0.0.40
codegen_flags: <defaults>
</compile_context>

<pallas_src>
import numpy as np
import jax
import jax.numpy as jnp
from jax import lax
from jax.experimental import pallas as pl
from jax.experimental.pallas import tpu as pltpu


# ---------------------------------------------------------------------------
# Deterministic SRM high-pass filters (srm_filter_kernel.py equivalents).
# ---------------------------------------------------------------------------
square_3x3 = np.array([[-1,  2, -1],
                       [ 2, -4,  2],
                       [-1,  2, -1]], dtype=np.float32) / 4.0

normalized_hpf_3x3_list = [
    square_3x3,
    np.array([[0, 0, 0], [1, -2, 1], [0, 0, 0]], dtype=np.float32) / 2.0,
    np.array([[0, 1, 0], [0, -2, 0], [0, 1, 0]], dtype=np.float32) / 2.0,
    np.array([[1, 0, 0], [0, -2, 0], [0, 0, 1]], dtype=np.float32) / 2.0,
]

square_5x5 = np.array([[-1,  2,  -2,  2, -1],
                       [ 2, -6,   8, -6,  2],
                       [-2,  8, -12,  8, -2],
                       [ 2, -6,   8, -6,  2],
                       [-1,  2,  -2,  2, -1]], dtype=np.float32) / 12.0

normalized_hpf_5x5_list = [
    square_5x5,
    np.array([[0,  0,  0,  0, 0],
              [0, -1,  2, -1, 0],
              [0,  2, -4,  2, 0],
              [0, -1,  2, -1, 0],
              [0,  0,  0,  0, 0]], dtype=np.float32) / 4.0,
]

F3 = len(normalized_hpf_3x3_list)
F5 = len(normalized_hpf_5x5_list)
F_TOTAL = F3 + F5
PAD = 2           # unified 5x5 window -> padding=2 halo on each side


def _unified_taps():
    """(F_TOTAL, 5, 5) taps; 3x3 filters zero-embedded at the centre."""
    w5 = np.zeros((F_TOTAL, 5, 5), dtype=np.float32)
    for idx, hpf in enumerate(normalized_hpf_3x3_list):
        w5[idx, 1:4, 1:4] = hpf
    for idx, hpf in enumerate(normalized_hpf_5x5_list):
        w5[F3 + idx] = hpf
    return w5


def _tap_groups():
    """[((i, j), [(filter, weight), ...]), ...] for nonzero taps only.

    Zero taps are folded out at compile time; weights become immediates.
    """
    w5 = _unified_taps()
    groups = []
    for i in range(5):
        for j in range(5):
            fl = [(f, float(w5[f, i, j])) for f in range(F_TOTAL)
                  if float(w5[f, i, j]) != 0.0]
            if fl:
                groups.append(((i, j), fl))
    return groups


TAP_GROUPS = _tap_groups()     # 25 tap positions, 52 (filter, weight) pairs


# ---------------------------------------------------------------------------
# Pallas kernel factory
# ---------------------------------------------------------------------------
def make_srm_forward(N, C, H, W, out_dtype=jnp.float32):
    """Returns forward(x, a, b, scale) -> (N, F_TOTAL, H, W)."""
    Hp, Wp = H + 2 * PAD, W + 2 * PAD
    out_isize = jnp.dtype(out_dtype).itemsize

    # ---- generation-aware tiling: images per grid step (Nb) ---------------
    try:
        vmem_cap = int(pltpu.get_tpu_info().vmem_capacity_bytes)
    except Exception:
        vmem_cap = 64 * 1024 * 1024    # v7x per-TensorCore VMEM (smallest part)

    per_image = (2 * C * H * W * 4                 # input block, double-buffered
                 + 2 * F_TOTAL * H * W * out_isize  # output block, double-buffered
                 + Hp * Wp * 4                      # padded channel-sum scratch
                 + F_TOTAL * H * W * 4)             # live f32 accumulators
    budget = vmem_cap // 2                          # headroom for the compiler

    Nb = 1
    for nb in range(1, N + 1):
        if N % nb != 0:
            continue
        if N >= 2 and (N // nb) < 2:
            continue      # keep >= 2 grid steps so both v7x TensorCores get work
        if nb * per_image > budget:
            continue
        Nb = nb
    grid = (N // Nb,)

    vmem_limit = int(min(vmem_cap * 3 // 4,
                         max(32 * 1024 * 1024, 2 * Nb * per_image + (8 << 20))))

    def srm_kernel(x_ref, a_ref, b_ref, s_ref, out_ref, xpad_ref):
        # x_ref    : (Nb, C, H, W)        VMEM  input block (Nb images)
        # a_ref    : (F_TOTAL,)           SMEM  BN mult term gamma/sqrt(var+eps)
        # b_ref    : (F_TOTAL,)           SMEM  BN add  term beta - mean*a
        # s_ref    : (1,)                 SMEM  learnable output scale
        # out_ref  : (Nb, F_TOTAL, H, W)  VMEM
        # xpad_ref : (Nb, Hp, Wp) f32     VMEM scratch: zero-padded channel-sum

        # 1) Zero-pad + channel-sum entirely in VMEM (no HBM pad copy).
        #    The scratch persists across grid steps, so the halo is re-zeroed
        #    every step (also correct if the grid axis is split across cores).
        xpad_ref[...] = jnp.zeros_like(xpad_ref)
        xpad_ref[:, PAD:PAD + H, PAD:PAD + W] = jnp.sum(
            x_ref[...].astype(jnp.float32), axis=1)

        # 2) Tap-major accumulation: each shifted (Nb, H, W) slice is built
        #    exactly once; compile-time weights (zero taps folded) feed every
        #    filter with a nonzero coefficient at that tap.
        acc = [None] * F_TOTAL
        for (i, j), filters in TAP_GROUPS:        # statically unrolled
            sl = xpad_ref[:, i:i + H, j:j + W]
            for f, wv in filters:
                contrib = sl * wv
                acc[f] = contrib if acc[f] is None else acc[f] + contrib

        # 3) BatchNorm (inference affine) + ReLU + scale, per-filter stores.
        #    With W a multiple of 128 these are unmasked lane-dense vsts.
        s = s_ref[0]
        for f in range(F_TOTAL):
            y = jnp.maximum(acc[f] * a_ref[f] + b_ref[f], 0.0) * s
            out_ref[:, f] = y.astype(out_ref.dtype)

    def forward(x, a, b, scale):
        return pl.pallas_call(
            srm_kernel,
            out_shape=jax.ShapeDtypeStruct((N, F_TOTAL, H, W), out_dtype),
            grid=grid,
            in_specs=[
                pl.BlockSpec((Nb, C, H, W), lambda g: (g, 0, 0, 0)),
                pl.BlockSpec(memory_space=pltpu.SMEM),
                pl.BlockSpec(memory_space=pltpu.SMEM),
                pl.BlockSpec(memory_space=pltpu.SMEM),
            ],
            out_specs=pl.BlockSpec((Nb, F_TOTAL, H, W), lambda g: (g, 0, 0, 0)),
            scratch_shapes=[pltpu.VMEM((Nb, Hp, Wp), jnp.float32)],
            compiler_params=pltpu.CompilerParams(
                dimension_semantics=("parallel",),
                vmem_limit_bytes=vmem_limit),
        )(x, a, b, scale)

    return forward


# ---------------------------------------------------------------------------
# Parameters (deterministic, matching SRMConv.__init__ default state)
# ---------------------------------------------------------------------------
def build_params(in_channels):
    # Full NCHW conv weights (for the pure-JAX reference check only).
    w3_full = jnp.asarray(np.stack(
        [np.tile(h[None, :, :], (in_channels, 1, 1))
         for h in normalized_hpf_3x3_list], axis=0))          # (F3, C, 3, 3)
    w5_full = jnp.asarray(np.stack(
        [np.tile(h[None, :, :], (in_channels, 1, 1))
         for h in normalized_hpf_5x5_list], axis=0))          # (F5, C, 5, 5)

    # BatchNorm2d default init, inference math: gamma=1, beta=0, mean=0,
    # var=1, eps=1e-5.  scale = ones(1).
    eps = 1e-5
    gamma = jnp.ones((F_TOTAL,), jnp.float32)
    beta = jnp.zeros((F_TOTAL,), jnp.float32)
    r_mean = jnp.zeros((F_TOTAL,), jnp.float32)
    r_var = jnp.ones((F_TOTAL,), jnp.float32)
    a = gamma / jnp.sqrt(r_var + eps)
    b = beta - r_mean * a
    scale = jnp.ones((1,), jnp.float32)
    return w3_full, w5_full, a, b, scale


def reference_forward(x, w3_full, w5_full, a, b, scale):
    dn = ('NCHW', 'OIHW', 'NCHW')
    y3 = lax.conv_general_dilated(x, w3_full, (1, 1),
                                  ((1, 1), (1, 1)), dimension_numbers=dn)
    y5 = lax.conv_general_dilated(x, w5_full, (1, 1),
                                  ((2, 2), (2, 2)), dimension_numbers=dn)
    y = jnp.concatenate([y3, y5], axis=1)
    y = y * a[None, :, None, None] + b[None, :, None, None]
    y = jnp.maximum(y, 0.0) * scale[0]
    return y


if __name__ == "__main__":
    # W is a multiple of 128 so the NCHW output stores are lane-dense
    # (the kernel also works for W < 128, just with masked partial stores).
    N, C, H, W = 4, 3, 16, 128
    key = jax.random.PRNGKey(0)
    x = jax.random.normal(key, (N, C, H, W), dtype=jnp.float32)

    w3_full, w5_full, a, b, scale = build_params(C)

    forward = make_srm_forward(N, C, H, W, out_dtype=jnp.float32)
    out = jax.block_until_ready(forward(x, a, b, scale))

    ref = jax.block_until_ready(
        reference_forward(x, w3_full, w5_full, a, b, scale))

    assert out.shape == (N, F_TOTAL, H, W)
    np.testing.assert_allclose(np.asarray(out), np.asarray(ref),
                               rtol=1e-4, atol=1e-4)
    print("KERNEL_OK")
</pallas_src>

<mosaic_0001>
module attributes {stable_mosaic.version = 11 : i64} {
  func.func @srm_kernel(%arg0: i32, %arg1: memref<2x3x16x128xf32, #tpu.memory_space<vmem>>, %arg2: memref<6xf32, #tpu.memory_space<smem>>, %arg3: memref<6xf32, #tpu.memory_space<smem>>, %arg4: memref<1xf32, #tpu.memory_space<smem>>, %arg5: memref<2x6x16x128xf32, #tpu.memory_space<vmem>>, %arg6: memref<2x20x132xf32, #tpu.memory_space<vmem>>) attributes {dimension_semantics = [#tpu.dimension_semantics<parallel>], iteration_bounds = array<i64: 2>, scalar_prefetch = 0 : i64, scratch_operands = 1 : i64, tpu.core_type = #tpu.core_type<tc>, window_params = [{transform_indices = @transform_0, window_bounds = array<i64: 2, 3, 16, 128>}, {transform_indices = @transform_1, window_bounds = array<i64: 6>}, {transform_indices = @transform_2, window_bounds = array<i64: 6>}, {transform_indices = @transform_3, window_bounds = array<i64: 1>}, {transform_indices = @transform_4, window_bounds = array<i64: 2, 6, 16, 128>}]} {
    %cst = arith.constant 0.000000e+00 : f32
    %0 = vector.broadcast %cst : f32 to vector<2x20x132xf32>
    %c0 = arith.constant 0 : index
    %c0_0 = arith.constant 0 : index
    %c0_1 = arith.constant 0 : index
    %1 = vector.load %arg6[%c0, %c0_0, %c0_1] : memref<2x20x132xf32, #tpu.memory_space<vmem>>, vector<2x20x132xf32>
    tpu.vector_store %arg6[%c0, %c0_0, %c0_1], %0 {strides = array<i32>} : memref<2x20x132xf32, #tpu.memory_space<vmem>>, vector<2x20x132xf32>,
    %c0_2 = arith.constant 0 : index
    %c0_3 = arith.constant 0 : index
    %c0_4 = arith.constant 0 : index
    %c0_5 = arith.constant 0 : index
    %2 = vector.load %arg1[%c0_2, %c0_3, %c0_4, %c0_5] : memref<2x3x16x128xf32, #tpu.memory_space<vmem>>, vector<2x3x16x128xf32>
    %cst_6 = arith.constant dense<0.000000e+00> : vector<2x16x128xf32>
    %3 = vector.multi_reduction <add>, %2, %cst_6 [1] : vector<2x3x16x128xf32> to vector<2x16x128xf32>
    %c0_7 = arith.constant 0 : index
    %c2 = arith.constant 2 : index
    %c2_8 = arith.constant 2 : index
    %4 = vector.load %arg6[%c0_7, %c2, %c2_8] : memref<2x20x132xf32, #tpu.memory_space<vmem>>, vector<2x16x128xf32>
    tpu.vector_store %arg6[%c0_7, %c2, %c2_8], %3 {strides = array<i32>} : memref<2x20x132xf32, #tpu.memory_space<vmem>>, vector<2x16x128xf32>,
    %c0_9 = arith.constant 0 : index
    %c0_10 = arith.constant 0 : index
    %c0_11 = arith.constant 0 : index
    %5 = vector.load %arg6[%c0_9, %c0_10, %c0_11] : memref<2x20x132xf32, #tpu.memory_space<vmem>>, vector<2x16x128xf32>
    %cst_12 = arith.constant -0.0833333358 : f32
    %6 = vector.broadcast %cst_12 : f32 to vector<2x16x128xf32>
    %7 = arith.mulf %5, %6 : vector<2x16x128xf32>
    %c0_13 = arith.constant 0 : index
    %c0_14 = arith.constant 0 : index
    %c1 = arith.constant 1 : index
    %8 = vector.load %arg6[%c0_13, %c0_14, %c1] : memref<2x20x132xf32, #tpu.memory_space<vmem>>, vector<2x16x128xf32>
    %cst_15 = arith.constant 0.166666672 : f32
    %9 = vector.broadcast %cst_15 : f32 to vector<2x16x128xf32>
    %10 = arith.mulf %8, %9 : vector<2x16x128xf32>
    %11 = arith.addf %7, %10 : vector<2x16x128xf32>
    %c0_16 = arith.constant 0 : index
    %c0_17 = arith.constant 0 : index
    %c2_18 = arith.constant 2 : index
    %12 = vector.load %arg6[%c0_16, %c0_17, %c2_18] : memref<2x20x132xf32, #tpu.memory_space<vmem>>, vector<2x16x128xf32>
    %cst_19 = arith.constant -0.166666672 : f32
    %13 = vector.broadcast %cst_19 : f32 to vector<2x16x128xf32>
    %14 = arith.mulf %12, %13 : vector<2x16x128xf32>
    %15 = arith.addf %11, %14 : vector<2x16x128xf32>
    %c0_20 = arith.constant 0 : index
    %c0_21 = arith.constant 0 : index
    %c3 = arith.constant 3 : index
    %16 = vector.load %arg6[%c0_20, %c0_21, %c3] : memref<2x20x132xf32, #tpu.memory_space<vmem>>, vector<2x16x128xf32>
    %cst_22 = arith.constant 0.166666672 : f32
    %17 = vector.broadcast %cst_22 : f32 to vector<2x16x128xf32>
    %18 = arith.mulf %16, %17 : vector<2x16x128xf32>
    %19 = arith.addf %15, %18 : vector<2x16x128xf32>
    %c0_23 = arith.constant 0 : index
    %c0_24 = arith.constant 0 : index
    %c4 = arith.constant 4 : index
    %20 = vector.load %arg6[%c0_23, %c0_24, %c4] : memref<2x20x132xf32, #tpu.memory_space<vmem>>, vector<2x16x128xf32>
    %cst_25 = arith.constant -0.0833333358 : f32
    %21 = vector.broadcast %cst_25 : f32 to vector<2x16x128xf32>
    %22 = arith.mulf %20, %21 : vector<2x16x128xf32>
    %23 = arith.addf %19, %22 : vector<2x16x128xf32>
    %c0_26 = arith.constant 0 : index
    %c1_27 = arith.constant 1 : index
    %c0_28 = arith.constant 0 : index
    %24 = vector.load %arg6[%c0_26, %c1_27, %c0_28] : memref<2x20x132xf32, #tpu.memory_space<vmem>>, vector<2x16x128xf32>
    %cst_29 = arith.constant 0.166666672 : f32
    %25 = vector.broadcast %cst_29 : f32 to vector<2x16x128xf32>
    %26 = arith.mulf %24, %25 : vector<2x16x128xf32>
    %27 = arith.addf %23, %26 : vector<2x16x128xf32>
    %c0_30 = arith.constant 0 : index
    %c1_31 = arith.constant 1 : index
    %c1_32 = arith.constant 1 : index
    %28 = vector.load %arg6[%c0_30, %c1_31, %c1_32] : memref<2x20x132xf32, #tpu.memory_space<vmem>>, vector<2x16x128xf32>
    %cst_33 = arith.constant -2.500000e-01 : f32
    %29 = vector.broadcast %cst_33 : f32 to vector<2x16x128xf32>
    %30 = arith.mulf %28, %29 : vector<2x16x128xf32>
    %cst_34 = arith.constant 5.000000e-01 : f32
    %31 = vector.broadcast %cst_34 : f32 to vector<2x16x128xf32>
    %32 = arith.mulf %28, %31 : vector<2x16x128xf32>
    %cst_35 = arith.constant -5.000000e-01 : f32
    %33 = vector.broadcast %cst_35 : f32 to vector<2x16x128xf32>
    %34 = arith.mulf %28, %33 : vector<2x16x128xf32>
    %35 = arith.addf %27, %34 : vector<2x16x128xf32>
    %cst_36 = arith.constant -2.500000e-01 : f32
    %36 = vector.broadcast %cst_36 : f32 to vector<2x16x128xf32>
    %37 = arith.mulf %28, %36 : vector<2x16x128xf32>
    %c0_37 = arith.constant 0 : index
    %c1_38 = arith.constant 1 : index
    %c2_39 = arith.constant 2 : index
    %38 = vector.load %arg6[%c0_37, %c1_38, %c2_39] : memref<2x20x132xf32, #tpu.memory_space<vmem>>, vector<2x16x128xf32>
    %cst_40 = arith.constant 5.000000e-01 : f32
    %39 = vector.broadcast %cst_40 : f32 to vector<2x16x128xf32>
    %40 = arith.mulf %38, %39 : vector<2x16x128xf32>
    %41 = arith.addf %30, %40 : vector<2x16x128xf32>
    %cst_41 = arith.constant 5.000000e-01 : f32
    %42 = vector.broadcast %cst_41 : f32 to vector<2x16x128xf32>
    %43 = arith.mulf %38, %42 : vector<2x16x128xf32>
    %cst_42 = arith.constant 0.666666686 : f32
    %44 = vector.broadcast %cst_42 : f32 to vector<2x16x128xf32>
    %45 = arith.mulf %38, %44 : vector<2x16x128xf32>
    %46 = arith.addf %35, %45 : vector<2x16x128xf32>
    %cst_43 = arith.constant 5.000000e-01 : f32
    %47 = vector.broadcast %cst_43 : f32 to vector<2x16x128xf32>
    %48 = arith.mulf %38, %47 : vector<2x16x128xf32>
    %49 = arith.addf %37, %48 : vector<2x16x128xf32>
    %c0_44 = arith.constant 0 : index
    %c1_45 = arith.constant 1 : index
    %c3_46 = arith.constant 3 : index
    %50 = vector.load %arg6[%c0_44, %c1_45, %c3_46] : memref<2x20x132xf32, #tpu.memory_space<vmem>>, vector<2x16x128xf32>
    %cst_47 = arith.constant -2.500000e-01 : f32
    %51 = vector.broadcast %cst_47 : f32 to vector<2x16x128xf32>
    %52 = arith.mulf %50, %51 : vector<2x16x128xf32>
    %53 = arith.addf %41, %52 : vector<2x16x128xf32>
    %cst_48 = arith.constant -5.000000e-01 : f32
    %54 = vector.broadcast %cst_48 : f32 to vector<2x16x128xf32>
    %55 = arith.mulf %50, %54 : vector<2x16x128xf32>
    %56 = arith.addf %46, %55 : vector<2x16x128xf32>
    %cst_49 = arith.constant -2.500000e-01 : f32
    %57 = vector.broadcast %cst_49 : f32 to vector<2x16x128xf32>
    %58 = arith.mulf %50, %57 : vector<2x16x128xf32>
    %59 = arith.addf %49, %58 : vector<2x16x128xf32>
    %c0_50 = arith.constant 0 : index
    %c1_51 = arith.constant 1 : index
    %c4_52 = arith.constant 4 : index
    %60 = vector.load %arg6[%c0_50, %c1_51, %c4_52] : memref<2x20x132xf32, #tpu.memory_space<vmem>>, vector<2x16x128xf32>
    %cst_53 = arith.constant 0.166666672 : f32
    %61 = vector.broadcast %cst_53 : f32 to vector<2x16x128xf32>
    %62 = arith.mulf %60, %61 : vector<2x16x128xf32>
    %63 = arith.addf %56, %62 : vector<2x16x128xf32>
    %c0_54 = arith.constant 0 : index
    %c2_55 = arith.constant 2 : index
    %c0_56 = arith.constant 0 : index
    %64 = vector.load %arg6[%c0_54, %c2_55, %c0_56] : memref<2x20x132xf32, #tpu.memory_space<vmem>>, vector<2x16x128xf32>
    %cst_57 = arith.constant -0.166666672 : f32
    %65 = vector.broadcast %cst_57 : f32 to vector<2x16x128xf32>
    %66 = arith.mulf %64, %65 : vector<2x16x128xf32>
    %67 = arith.addf %63, %66 : vector<2x16x128xf32>
    %c0_58 = arith.constant 0 : index
    %c2_59 = arith.constant 2 : index
    %c1_60 = arith.constant 1 : index
    %68 = vector.load %arg6[%c0_58, %c2_59, %c1_60] : memref<2x20x132xf32, #tpu.memory_space<vmem>>, vector<2x16x128xf32>
    %cst_61 = arith.constant 5.000000e-01 : f32
    %69 = vector.broadcast %cst_61 : f32 to vector<2x16x128xf32>
    %70 = arith.mulf %68, %69 : vector<2x16x128xf32>
    %71 = arith.addf %53, %70 : vector<2x16x128xf32>
    %cst_62 = arith.constant 5.000000e-01 : f32
    %72 = vector.broadcast %cst_62 : f32 to vector<2x16x128xf32>
    %73 = arith.mulf %68, %72 : vector<2x16x128xf32>
    %cst_63 = arith.constant 0.666666686 : f32
    %74 = vector.broadcast %cst_63 : f32 to vector<2x16x128xf32>
    %75 = arith.mulf %68, %74 : vector<2x16x128xf32>
    %76 = arith.addf %67, %75 : vector<2x16x128xf32>
    %cst_64 = arith.constant 5.000000e-01 : f32
    %77 = vector.broadcast %cst_64 : f32 to vector<2x16x128xf32>
    %78 = arith.mulf %68, %77 : vector<2x16x128xf32>
    %79 = arith.addf %59, %78 : vector<2x16x128xf32>
    %c0_65 = arith.constant 0 : index
    %c2_66 = arith.constant 2 : index
    %c2_67 = arith.constant 2 : index
    %80 = vector.load %arg6[%c0_65, %c2_66, %c2_67] : memref<2x20x132xf32, #tpu.memory_space<vmem>>, vector<2x16x128xf32>
    %cst_68 = arith.constant -1.000000e+00 : f32
    %81 = vector.broadcast %cst_68 : f32 to vector<2x16x128xf32>
    %82 = arith.mulf %80, %81 : vector<2x16x128xf32>
    %83 = arith.addf %71, %82 : vector<2x16x128xf32>
    %cst_69 = arith.constant -1.000000e+00 : f32
    %84 = vector.broadcast %cst_69 : f32 to vector<2x16x128xf32>
    %85 = arith.mulf %80, %84 : vector<2x16x128xf32>
    %86 = arith.addf %73, %85 : vector<2x16x128xf32>
    %cst_70 = arith.constant -1.000000e+00 : f32
    %87 = vector.broadcast %cst_70 : f32 to vector<2x16x128xf32>
    %88 = arith.mulf %80, %87 : vector<2x16x128xf32>
    %89 = arith.addf %43, %88 : vector<2x16x128xf32>
    %cst_71 = arith.constant -1.000000e+00 : f32
    %90 = vector.broadcast %cst_71 : f32 to vector<2x16x128xf32>
    %91 = arith.mulf %80, %90 : vector<2x16x128xf32>
    %92 = arith.addf %32, %91 : vector<2x16x128xf32>
    %cst_72 = arith.constant -1.000000e+00 : f32
    %93 = vector.broadcast %cst_72 : f32 to vector<2x16x128xf32>
    %94 = arith.mulf %80, %93 : vector<2x16x128xf32>
    %95 = arith.addf %76, %94 : vector<2x16x128xf32>
    %cst_73 = arith.constant -1.000000e+00 : f32
    %96 = vector.broadcast %cst_73 : f32 to vector<2x16x128xf32>
    %97 = arith.mulf %80, %96 : vector<2x16x128xf32>
    %98 = arith.addf %79, %97 : vector<2x16x128xf32>
    %c0_74 = arith.constant 0 : index
    %c2_75 = arith.constant 2 : index
    %c3_76 = arith.constant 3 : index
    %99 = vector.load %arg6[%c0_74, %c2_75, %c3_76] : memref<2x20x132xf32, #tpu.memory_space<vmem>>, vector<2x16x128xf32>
    %cst_77 = arith.constant 5.000000e-01 : f32
    %100 = vector.broadcast %cst_77 : f32 to vector<2x16x128xf32>
    %101 = arith.mulf %99, %100 : vector<2x16x128xf32>
    %102 = arith.addf %83, %101 : vector<2x16x128xf32>
    %cst_78 = arith.constant 5.000000e-01 : f32
    %103 = vector.broadcast %cst_78 : f32 to vector<2x16x128xf32>
    %104 = arith.mulf %99, %103 : vector<2x16x128xf32>
    %105 = arith.addf %86, %104 : vector<2x16x128xf32>
    %cst_79 = arith.constant 0.666666686 : f32
    %106 = vector.broadcast %cst_79 : f32 to vector<2x16x128xf32>
    %107 = arith.mulf %99, %106 : vector<2x16x128xf32>
    %108 = arith.addf %95, %107 : vector<2x16x128xf32>
    %cst_80 = arith.constant 5.000000e-01 : f32
    %109 = vector.broadcast %cst_80 : f32 to vector<2x16x128xf32>
    %110 = arith.mulf %99, %109 : vector<2x16x128xf32>
    %111 = arith.addf %98, %110 : vector<2x16x128xf32>
    %c0_81 = arith.constant 0 : index
    %c2_82 = arith.constant 2 : index
    %c4_83 = arith.constant 4 : index
    %112 = vector.load %arg6[%c0_81, %c2_82, %c4_83] : memref<2x20x132xf32, #tpu.memory_space<vmem>>, vector<2x16x128xf32>
    %cst_84 = arith.constant -0.166666672 : f32
    %113 = vector.broadcast %cst_84 : f32 to vector<2x16x128xf32>
    %114 = arith.mulf %112, %113 : vector<2x16x128xf32>
    %115 = arith.addf %108, %114 : vector<2x16x128xf32>
    %c0_85 = arith.constant 0 : index
    %c3_86 = arith.constant 3 : index
    %c0_87 = arith.constant 0 : index
    %116 = vector.load %arg6[%c0_85, %c3_86, %c0_87] : memref<2x20x132xf32, #tpu.memory_space<vmem>>, vector<2x16x128xf32>
    %cst_88 = arith.constant 0.166666672 : f32
    %117 = vector.broadcast %cst_88 : f32 to vector<2x16x128xf32>
    %118 = arith.mulf %116, %117 : vector<2x16x128xf32>
    %119 = arith.addf %115, %118 : vector<2x16x128xf32>
    %c0_89 = arith.constant 0 : index
    %c3_90 = arith.constant 3 : index
    %c1_91 = arith.constant 1 : index
    %120 = vector.load %arg6[%c0_89, %c3_90, %c1_91] : memref<2x20x132xf32, #tpu.memory_space<vmem>>, vector<2x16x128xf32>
    %cst_92 = arith.constant -2.500000e-01 : f32
    %121 = vector.broadcast %cst_92 : f32 to vector<2x16x128xf32>
    %122 = arith.mulf %120, %121 : vector<2x16x128xf32>
    %123 = arith.addf %102, %122 : vector<2x16x128xf32>
    %cst_93 = arith.constant -5.000000e-01 : f32
    %124 = vector.broadcast %cst_93 : f32 to vector<2x16x128xf32>
    %125 = arith.mulf %120, %124 : vector<2x16x128xf32>
    %126 = arith.addf %119, %125 : vector<2x16x128xf32>
    %cst_94 = arith.constant -2.500000e-01 : f32
    %127 = vector.broadcast %cst_94 : f32 to vector<2x16x128xf32>
    %128 = arith.mulf %120, %127 : vector<2x16x128xf32>
    %129 = arith.addf %111, %128 : vector<2x16x128xf32>
    %c0_95 = arith.constant 0 : index
    %c3_96 = arith.constant 3 : index
    %c2_97 = arith.constant 2 : index
    %130 = vector.load %arg6[%c0_95, %c3_96, %c2_97] : memref<2x20x132xf32, #tpu.memory_space<vmem>>, vector<2x16x128xf32>
    %cst_98 = arith.constant 5.000000e-01 : f32
    %131 = vector.broadcast %cst_98 : f32 to vector<2x16x128xf32>
    %132 = arith.mulf %130, %131 : vector<2x16x128xf32>
    %133 = arith.addf %123, %132 : vector<2x16x128xf32>
    %cst_99 = arith.constant 5.000000e-01 : f32
    %134 = vector.broadcast %cst_99 : f32 to vector<2x16x128xf32>
    %135 = arith.mulf %130, %134 : vector<2x16x128xf32>
    %136 = arith.addf %89, %135 : vector<2x16x128xf32>
    %cst_100 = arith.constant 0.666666686 : f32
    %137 = vector.broadcast %cst_100 : f32 to vector<2x16x128xf32>
    %138 = arith.mulf %130, %137 : vector<2x16x128xf32>
    %139 = arith.addf %126, %138 : vector<2x16x128xf32>
    %cst_101 = arith.constant 5.000000e-01 : f32
    %140 = vector.broadcast %cst_101 : f32 to vector<2x16x128xf32>
    %141 = arith.mulf %130, %140 : vector<2x16x128xf32>
    %142 = arith.addf %129, %141 : vector<2x16x128xf32>
    %c0_102 = arith.constant 0 : index
    %c3_103 = arith.constant 3 : index
    %c3_104 = arith.constant 3 : index
    %143 = vector.load %arg6[%c0_102, %c3_103, %c3_104] : memref<2x20x132xf32, #tpu.memory_space<vmem>>, vector<2x16x128xf32>
    %cst_105 = arith.constant -2.500000e-01 : f32
    %144 = vector.broadcast %cst_105 : f32 to vector<2x16x128xf32>
    %145 = arith.mulf %143, %144 : vector<2x16x128xf32>
    %146 = arith.addf %133, %145 : vector<2x16x128xf32>
    %cst_106 = arith.constant 5.000000e-01 : f32
    %147 = vector.broadcast %cst_106 : f32 to vector<2x16x128xf32>
    %148 = arith.mulf %143, %147 : vector<2x16x128xf32>
    %149 = arith.addf %92, %148 : vector<2x16x128xf32>
    %cst_107 = arith.constant -5.000000e-01 : f32
    %150 = vector.broadcast %cst_107 : f32 to vector<2x16x128xf32>
    %151 = arith.mulf %143, %150 : vector<2x16x128xf32>
    %152 = arith.addf %139, %151 : vector<2x16x128xf32>
    %cst_108 = arith.constant -2.500000e-01 : f32
    %153 = vector.broadcast %cst_108 : f32 to vector<2x16x128xf32>
    %154 = arith.mulf %143, %153 : vector<2x16x128xf32>
    %155 = arith.addf %142, %154 : vector<2x16x128xf32>
    %c0_109 = arith.constant 0 : index
    %c3_110 = arith.constant 3 : index
    %c4_111 = arith.constant 4 : index
    %156 = vector.load %arg6[%c0_109, %c3_110, %c4_111] : memref<2x20x132xf32, #tpu.memory_space<vmem>>, vector<2x16x128xf32>
    %cst_112 = arith.constant 0.166666672 : f32
    %157 = vector.broadcast %cst_112 : f32 to vector<2x16x128xf32>
    %158 = arith.mulf %156, %157 : vector<2x16x128xf32>
    %159 = arith.addf %152, %158 : vector<2x16x128xf32>
    %c0_113 = arith.constant 0 : index
    %c4_114 = arith.constant 4 : index
    %c0_115 = arith.constant 0 : index
    %160 = vector.load %arg6[%c0_113, %c4_114, %c0_115] : memref<2x20x132xf32, #tpu.memory_space<vmem>>, vector<2x16x128xf32>
    %cst_116 = arith.constant -0.0833333358 : f32
    %161 = vector.broadcast %cst_116 : f32 to vector<2x16x128xf32>
    %162 = arith.mulf %160, %161 : vector<2x16x128xf32>
    %163 = arith.addf %159, %162 : vector<2x16x128xf32>
    %c0_117 = arith.constant 0 : index
    %c4_118 = arith.constant 4 : index
    %c1_119 = arith.constant 1 : index
    %164 = vector.load %arg6[%c0_117, %c4_118, %c1_119] : memref<2x20x132xf32, #tpu.memory_space<vmem>>, vector<2x16x128xf32>
    %cst_120 = arith.constant 0.166666672 : f32
    %165 = vector.broadcast %cst_120 : f32 to vector<2x16x128xf32>
    %166 = arith.mulf %164, %165 : vector<2x16x128xf32>
    %167 = arith.addf %163, %166 : vector<2x16x128xf32>
    %c0_121 = arith.constant 0 : index
    %c4_122 = arith.constant 4 : index
    %c2_123 = arith.constant 2 : index
    %168 = vector.load %arg6[%c0_121, %c4_122, %c2_123] : memref<2x20x132xf32, #tpu.memory_space<vmem>>, vector<2x16x128xf32>
    %cst_124 = arith.constant -0.166666672 : f32
    %169 = vector.broadcast %cst_124 : f32 to vector<2x16x128xf32>
    %170 = arith.mulf %168, %169 : vector<2x16x128xf32>
    %171 = arith.addf %167, %170 : vector<2x16x128xf32>
    %c0_125 = arith.constant 0 : index
    %c4_126 = arith.constant 4 : index
    %c3_127 = arith.constant 3 : index
    %172 = vector.load %arg6[%c0_125, %c4_126, %c3_127] : memref<2x20x132xf32, #tpu.memory_space<vmem>>, vector<2x16x128xf32>
    %cst_128 = arith.constant 0.166666672 : f32
    %173 = vector.broadcast %cst_128 : f32 to vector<2x16x128xf32>
    %174 = arith.mulf %172, %173 : vector<2x16x128xf32>
    %175 = arith.addf %171, %174 : vector<2x16x128xf32>
    %c0_129 = arith.constant 0 : index
    %c4_130 = arith.constant 4 : index
    %c4_131 = arith.constant 4 : index
    %176 = vector.load %arg6[%c0_129, %c4_130, %c4_131] : memref<2x20x132xf32, #tpu.memory_space<vmem>>, vector<2x16x128xf32>
    %cst_132 = arith.constant -0.0833333358 : f32
    %177 = vector.broadcast %cst_132 : f32 to vector<2x16x128xf32>
    %178 = arith.mulf %176, %177 : vector<2x16x128xf32>
    %179 = arith.addf %175, %178 : vector<2x16x128xf32>
    %c0_133 = arith.constant 0 : index
    %180 = memref.load %arg4[%c0_133] : memref<1xf32, #tpu.memory_space<smem>>
    %c0_134 = arith.constant 0 : index
    %181 = memref.load %arg2[%c0_134] : memref<6xf32, #tpu.memory_space<smem>>
    %182 = vector.broadcast %181 : f32 to vector<2x16x128xf32>
    %183 = arith.mulf %146, %182 : vector<2x16x128xf32>
    %c0_135 = arith.constant 0 : index
    %184 = memref.load %arg3[%c0_135] : memref<6xf32, #tpu.memory_space<smem>>
    %185 = vector.broadcast %184 : f32 to vector<2x16x128xf32>
    %186 = arith.addf %183, %185 : vector<2x16x128xf32>
    %cst_136 = arith.constant 0.000000e+00 : f32
    %187 = vector.broadcast %cst_136 : f32 to vector<2x16x128xf32>
    %188 = arith.maximumf %186, %187 : vector<2x16x128xf32>
    %189 = vector.broadcast %180 : f32 to vector<2x16x128xf32>
    %190 = arith.mulf %188, %189 : vector<2x16x128xf32>
    %c0_137 = arith.constant 0 : index
    %c0_138 = arith.constant 0 : index
    %c0_139 = arith.constant 0 : index
    %c0_140 = arith.constant 0 : index
    %191 = vector.load %arg5[%c0_137, %c0_138, %c0_139, %c0_140] : memref<2x6x16x128xf32, #tpu.memory_space<vmem>>, vector<2x1x16x128xf32>
    %192 = vector.shape_cast %191 : vector<2x1x16x128xf32> to vector<2x16x128xf32>
    %193 = vector.shape_cast %190 : vector<2x16x128xf32> to vector<2x1x16x128xf32>
    tpu.vector_store %arg5[%c0_137, %c0_138, %c0_139, %c0_140], %193 {strides = array<i32>} : memref<2x6x16x128xf32, #tpu.memory_space<vmem>>, vector<2x1x16x128xf32>,
    %c1_141 = arith.constant 1 : index
    %194 = memref.load %arg2[%c1_141] : memref<6xf32, #tpu.memory_space<smem>>
    %195 = vector.broadcast %194 : f32 to vector<2x16x128xf32>
    %196 = arith.mulf %105, %195 : vector<2x16x128xf32>
    %c1_142 = arith.constant 1 : index
    %197 = memref.load %arg3[%c1_142] : memref<6xf32, #tpu.memory_space<smem>>
    %198 = vector.broadcast %197 : f32 to vector<2x16x128xf32>
    %199 = arith.addf %196, %198 : vector<2x16x128xf32>
    %cst_143 = arith.constant 0.000000e+00 : f32
    %200 = vector.broadcast %cst_143 : f32 to vector<2x16x128xf32>
    %201 = arith.maximumf %199, %200 : vector<2x16x128xf32>
    %202 = vector.broadcast %180 : f32 to vector<2x16x128xf32>
    %203 = arith.mulf %201, %202 : vector<2x16x128xf32>
    %c0_144 = arith.constant 0 : index
    %c1_145 = arith.constant 1 : index
    %c0_146 = arith.constant 0 : index
    %c0_147 = arith.constant 0 : index
    %204 = vector.load %arg5[%c0_144, %c1_145, %c0_146, %c0_147] : memref<2x6x16x128xf32, #tpu.memory_space<vmem>>, vector<2x1x16x128xf32>
    %205 = vector.shape_cast %204 : vector<2x1x16x128xf32> to vector<2x16x128xf32>
    %206 = vector.shape_cast %203 : vector<2x16x128xf32> to vector<2x1x16x128xf32>
    tpu.vector_store %arg5[%c0_144, %c1_145, %c0_146, %c0_147], %206 {strides = array<i32>} : memref<2x6x16x128xf32, #tpu.memory_space<vmem>>, vector<2x1x16x128xf32>,
    %c2_148 = arith.constant 2 : index
    %207 = memref.load %arg2[%c2_148] : memref<6xf32, #tpu.memory_space<smem>>
    %208 = vector.broadcast %207 : f32 to vector<2x16x128xf32>
    %209 = arith.mulf %136, %208 : vector<2x16x128xf32>
    %c2_149 = arith.constant 2 : index
    %210 = memref.load %arg3[%c2_149] : memref<6xf32, #tpu.memory_space<smem>>
    %211 = vector.broadcast %210 : f32 to vector<2x16x128xf32>
    %212 = arith.addf %209, %211 : vector<2x16x128xf32>
    %cst_150 = arith.constant 0.000000e+00 : f32
    %213 = vector.broadcast %cst_150 : f32 to vector<2x16x128xf32>
    %214 = arith.maximumf %212, %213 : vector<2x16x128xf32>
    %215 = vector.broadcast %180 : f32 to vector<2x16x128xf32>
    %216 = arith.mulf %214, %215 : vector<2x16x128xf32>
    %c0_151 = arith.constant 0 : index
    %c2_152 = arith.constant 2 : index
    %c0_153 = arith.constant 0 : index
    %c0_154 = arith.constant 0 : index
    %217 = vector.load %arg5[%c0_151, %c2_152, %c0_153, %c0_154] : memref<2x6x16x128xf32, #tpu.memory_space<vmem>>, vector<2x1x16x128xf32>
    %218 = vector.shape_cast %217 : vector<2x1x16x128xf32> to vector<2x16x128xf32>
    %219 = vector.shape_cast %216 : vector<2x16x128xf32> to vector<2x1x16x128xf32>
    tpu.vector_store %arg5[%c0_151, %c2_152, %c0_153, %c0_154], %219 {strides = array<i32>} : memref<2x6x16x128xf32, #tpu.memory_space<vmem>>, vector<2x1x16x128xf32>,
    %c3_155 = arith.constant 3 : index
    %220 = memref.load %arg2[%c3_155] : memref<6xf32, #tpu.memory_space<smem>>
    %221 = vector.broadcast %220 : f32 to vector<2x16x128xf32>
    %222 = arith.mulf %149, %221 : vector<2x16x128xf32>
    %c3_156 = arith.constant 3 : index
    %223 = memref.load %arg3[%c3_156] : memref<6xf32, #tpu.memory_space<smem>>
    %224 = vector.broadcast %223 : f32 to vector<2x16x128xf32>
    %225 = arith.addf %222, %224 : vector<2x16x128xf32>
    %cst_157 = arith.constant 0.000000e+00 : f32
    %226 = vector.broadcast %cst_157 : f32 to vector<2x16x128xf32>
    %227 = arith.maximumf %225, %226 : vector<2x16x128xf32>
    %228 = vector.broadcast %180 : f32 to vector<2x16x128xf32>
    %229 = arith.mulf %227, %228 : vector<2x16x128xf32>
    %c0_158 = arith.constant 0 : index
    %c3_159 = arith.constant 3 : index
    %c0_160 = arith.constant 0 : index
    %c0_161 = arith.constant 0 : index
    %230 = vector.load %arg5[%c0_158, %c3_159, %c0_160, %c0_161] : memref<2x6x16x128xf32, #tpu.memory_space<vmem>>, vector<2x1x16x128xf32>
    %231 = vector.shape_cast %230 : vector<2x1x16x128xf32> to vector<2x16x128xf32>
    %232 = vector.shape_cast %229 : vector<2x16x128xf32> to vector<2x1x16x128xf32>
    tpu.vector_store %arg5[%c0_158, %c3_159, %c0_160, %c0_161], %232 {strides = array<i32>} : memref<2x6x16x128xf32, #tpu.memory_space<vmem>>, vector<2x1x16x128xf32>,
    %c4_162 = arith.constant 4 : index
    %233 = memref.load %arg2[%c4_162] : memref<6xf32, #tpu.memory_space<smem>>
    %234 = vector.broadcast %233 : f32 to vector<2x16x128xf32>
    %235 = arith.mulf %179, %234 : vector<2x16x128xf32>
    %c4_163 = arith.constant 4 : index
    %236 = memref.load %arg3[%c4_163] : memref<6xf32, #tpu.memory_space<smem>>
    %237 = vector.broadcast %236 : f32 to vector<2x16x128xf32>
    %238 = arith.addf %235, %237 : vector<2x16x128xf32>
    %cst_164 = arith.constant 0.000000e+00 : f32
    %239 = vector.broadcast %cst_164 : f32 to vector<2x16x128xf32>
    %240 = arith.maximumf %238, %239 : vector<2x16x128xf32>
    %241 = vector.broadcast %180 : f32 to vector<2x16x128xf32>
    %242 = arith.mulf %240, %241 : vector<2x16x128xf32>
    %c0_165 = arith.constant 0 : index
    %c4_166 = arith.constant 4 : index
    %c0_167 = arith.constant 0 : index
    %c0_168 = arith.constant 0 : index
    %243 = vector.load %arg5[%c0_165, %c4_166, %c0_167, %c0_168] : memref<2x6x16x128xf32, #tpu.memory_space<vmem>>, vector<2x1x16x128xf32>
    %244 = vector.shape_cast %243 : vector<2x1x16x128xf32> to vector<2x16x128xf32>
    %245 = vector.shape_cast %242 : vector<2x16x128xf32> to vector<2x1x16x128xf32>
    tpu.vector_store %arg5[%c0_165, %c4_166, %c0_167, %c0_168], %245 {strides = array<i32>} : memref<2x6x16x128xf32, #tpu.memory_space<vmem>>, vector<2x1x16x128xf32>,
    %c5 = arith.constant 5 : index
    %246 = memref.load %arg2[%c5] : memref<6xf32, #tpu.memory_space<smem>>
    %247 = vector.broadcast %246 : f32 to vector<2x16x128xf32>
    %248 = arith.mulf %155, %247 : vector<2x16x128xf32>
    %c5_169 = arith.constant 5 : index
    %249 = memref.load %arg3[%c5_169] : memref<6xf32, #tpu.memory_space<smem>>
    %250 = vector.broadcast %249 : f32 to vector<2x16x128xf32>
    %251 = arith.addf %248, %250 : vector<2x16x128xf32>
    %cst_170 = arith.constant 0.000000e+00 : f32
    %252 = vector.broadcast %cst_170 : f32 to vector<2x16x128xf32>
    %253 = arith.maximumf %251, %252 : vector<2x16x128xf32>
    %254 = vector.broadcast %180 : f32 to vector<2x16x128xf32>
    %255 = arith.mulf %253, %254 : vector<2x16x128xf32>
    %c0_171 = arith.constant 0 : index
    %c5_172 = arith.constant 5 : index
    %c0_173 = arith.constant 0 : index
    %c0_174 = arith.constant 0 : index
    %256 = vector.load %arg5[%c0_171, %c5_172, %c0_173, %c0_174] : memref<2x6x16x128xf32, #tpu.memory_space<vmem>>, vector<2x1x16x128xf32>
    %257 = vector.shape_cast %256 : vector<2x1x16x128xf32> to vector<2x16x128xf32>
    %258 = vector.shape_cast %255 : vector<2x16x128xf32> to vector<2x1x16x128xf32>
    tpu.vector_store %arg5[%c0_171, %c5_172, %c0_173, %c0_174], %258 {strides = array<i32>} : memref<2x6x16x128xf32, #tpu.memory_space<vmem>>, vector<2x1x16x128xf32>,
    return
  }
  func.func @transform_0(%arg0: i32) -> (i32, i32, i32, i32) {
    %c0_i32 = arith.constant 0 : i32
    %c0_i32_0 = arith.constant 0 : i32
    %c0_i32_1 = arith.constant 0 : i32
    %c0_i32_2 = arith.constant 0 : i32
    return %arg0, %c0_i32, %c0_i32_0, %c0_i32_1 : i32, i32, i32, i32
  }
  func.func @transform_1(%arg0: i32) -> i32 {
    %c0_i32 = arith.constant 0 : i32
    %c0_i32_0 = arith.constant 0 : i32
    return %c0_i32 : i32
  }
  func.func @transform_2(%arg0: i32) -> i32 {
    %c0_i32 = arith.constant 0 : i32
    %c0_i32_0 = arith.constant 0 : i32
    return %c0_i32 : i32
  }
  func.func @transform_3(%arg0: i32) -> i32 {
    %c0_i32 = arith.constant 0 : i32
    %c0_i32_0 = arith.constant 0 : i32
    return %c0_i32 : i32
  }
  func.func @transform_4(%arg0: i32) -> (i32, i32, i32, i32) {
    %c0_i32 = arith.constant 0 : i32
    %c0_i32_0 = arith.constant 0 : i32
    %c0_i32_1 = arith.constant 0 : i32
    %c0_i32_2 = arith.constant 0 : i32
    return %arg0, %c0_i32, %c0_i32_0, %c0_i32_1 : i32, i32, i32, i32
  }
}

</mosaic_0001>

<llo_original>
// kernel: tpu_custom_call.1
$region0: #{tpu_custom_call.1}
  #allocation0 [shape = 'u32[]', space=smem, size = 0x4, offset = 0x4, fixed_abs, tag = 'smem constant byte address 0x4 - core index']
  #allocation1 [shape = 'u32[144,128]{1,0:T(1,128)}', space=vmem, size = 0x12000, scoped, tag = 'internal scratch']
  #allocation2 [shape = 'f32[2,20,132]{2,1,0:T(8,128)}', space=vmem, size = 0xc000, scoped, tag = 'scratch operand']
  #allocation3 [shape = 'f32[1]{0:T(128)S(6)}', space=smem, size = 0x200, scoped, tag = 'scoped memory for tpu_custom_call.1']
  %s0 = inlined_call_operand.hbm [shape: f32[4,3,16,128], index: 0, kind: input, shape index: {}]
  %s1 = inlined_call_operand.vmem [shape: f32[6], index: 1, kind: input, shape index: {}]
  %s2 = inlined_call_operand.vmem [shape: f32[6], index: 2, kind: input, shape index: {}]
  %s3 = inlined_call_operand.<no memory space> [shape: f32[1], index: 3, kind: input, shape index: {}]
  %s4 = inlined_call_operand.hbm [shape: f32[4,6,16,128], index: 4, kind: output, shape index: {}]
  %s5 = sld [smem:[#allocation0]]
  $region61: #{tpu_custom_call.1} parent=0
    _
  %s7 = ssub.s32 1, %s5
  %s8 = scalar_select 0, %s7, %s5
  %9 = sst [smem:[#allocation3]] %s3
  $region1: #{tpu_custom_call.1} parent=0
    #allocation4 [shape = 'u8[98304]{0}', space=vmem, size = 0x18000, scoped, tag = 'input window, operand 0']
    #allocation5 [shape = 's32[2]{0}', space=sflag, size = 0x8, scoped, tag = 'scoped memory for tpu_custom_call.1']
    #allocation6 [shape = 's32[2]{0}', space=sflag, size = 0x8, scoped, tag = 'scoped memory for tpu_custom_call.1']
    #allocation7 [shape = 's32[2]{0}', space=sflag, size = 0x8, scoped, tag = 'scoped memory for tpu_custom_call.1']
    #allocation8 [shape = 'u8[512]{0}', space=smem, size = 0x200, scoped, tag = 'input window, operand 1, single buffered']
    #allocation9 [shape = 'u8[512]{0}', space=smem, size = 0x200, scoped, tag = 'input window, operand 2, single buffered']
    #allocation10 [shape = 's32[1]{0}', space=sflag, size = 0x4, scoped, tag = 'scoped memory for tpu_custom_call.1']
    #allocation11 [shape = 'u8[196608]{0}', space=vmem, size = 0x30000, scoped, tag = 'output window, operand 0']
    %10 = vsyncpa [#allocation5], 0
    %s11 = scalar_lea.sflag [#allocation5], 1
    %12 = vsyncpa %s11, 0
    %13 = vsyncpa [#allocation7], 0
    %14 = vsyncpa [#allocation10], 0
    %15 = vsyncpa [#allocation6], 0
    %s16 = scalar_lea.sflag [#allocation6], 1
    %17 = vsyncpa %s16, 0
    loop: start=0, step=1, limit=4
    $region2: #{tpu_custom_call.1} parent=1 // loop_pre_header
      _
    $region3: #{tpu_custom_call.1} parent=1 // loop_header
      %s19 = sphi 0, %s23
      %p20 = scmp.ge.s32.totalorder %s19, 4
      %s29 = sphi 0, %s31
      %s32 = sphi 0, %s29
      %s33 = sphi 0, %s32
      %s49 = sphi 0, %s33
      %s53 = sphi 0, %s53
      %s55 = sphi 0, %s53
      %s56 = sphi 0, %s55
      %s70 = sphi 0, %s56
      %s74 = sphi 0, %s74
      %s76 = sphi 0, %s74
      %s77 = sphi 0, %s76
      %s91 = sphi 0, %s77
      %s95 = sphi 0, %s95
      %s97 = sphi 0, %s95
      %s98 = sphi 0, %s97
      %s112 = sphi 0, %s98
      %s118 = sphi 0, %s120
      %s121 = sphi 0, %s118
      %s122 = sphi 0, %s121
      %s138 = sphi 0, %s122
    $region4: #{tpu_custom_call.1} parent=1 // loop_header_branch
      %22 = sbr.rel (%p20) target = $region8
    $region5: #{tpu_custom_call.1} parent=1 // loop_body
      %s24 = ssub.s32 %s19, 1
      %s25 = ssub.s32 %s19, 2
      %s26 = sadd.s32 %s19, 1
      %s27 = ssub.s32 %s19, %s26
      %p28 = scmp.eq.s32.totalorder %s27, 0
      %s30 = sadd.s32 %s29, 1
      %s31 = scalar_select %p28, %s29, %s30
      %p34 = pneg %p28
      %p35 = scmp.eq.s32.totalorder %s19, 1
      %p36 = por %p34, %p35
      %p37 = scmp.ne.s32.totalorder %s29, %s32
      %p38 = scmp.eq.s32.totalorder %s19, 0
      %p39 = por %p37, %p38
      %p40 = scmp.ne.s32.totalorder %s29, %s32
      %p41 = scmp.eq.s32.totalorder %s24, 1
      %p42 = por %p40, %p41
      %p43 = scmp.ne.s32.totalorder %s32, %s33
      %p44 = scmp.eq.s32.totalorder %s24, 0
      %p45 = por %p43, %p44
      %p46 = scmp.ne.s32.totalorder %s32, %s33
      %p47 = scmp.eq.s32.totalorder %s25, 1
      %p48 = por %p46, %p47
      %p50 = scmp.ne.s32.totalorder %s33, %s49
      %p51 = scmp.eq.s32.totalorder %s25, 0
      %p52 = por %p50, %p51
      %s54 = sadd.s32 %s53, 1
      %p57 = scmp.eq.s32.totalorder %s19, 1
      %p58 = scmp.ne.s32.totalorder %s53, %s55
      %p59 = scmp.eq.s32.totalorder %s19, 0
      %p60 = por %p58, %p59
      %p61 = scmp.ne.s32.totalorder %s53, %s55
      %p62 = scmp.eq.s32.totalorder %s24, 1
      %p63 = por %p61, %p62
      %p64 = scmp.ne.s32.totalorder %s55, %s56
      %p65 = scmp.eq.s32.totalorder %s24, 0
      %p66 = por %p64, %p65
      %p67 = scmp.ne.s32.totalorder %s55, %s56
      %p68 = scmp.eq.s32.totalorder %s25, 1
      %p69 = por %p67, %p68
      %p71 = scmp.ne.s32.totalorder %s56, %s70
      %p72 = scmp.eq.s32.totalorder %s25, 0
      %p73 = por %p71, %p72
      %s75 = sadd.s32 %s74, 1
      %p78 = scmp.eq.s32.totalorder %s19, 1
      %p79 = scmp.ne.s32.totalorder %s74, %s76
      %p80 = scmp.eq.s32.totalorder %s19, 0
      %p81 = por %p79, %p80
      %p82 = scmp.ne.s32.totalorder %s74, %s76
      %p83 = scmp.eq.s32.totalorder %s24, 1
      %p84 = por %p82, %p83
      %p85 = scmp.ne.s32.totalorder %s76, %s77
      %p86 = scmp.eq.s32.totalorder %s24, 0
      %p87 = por %p85, %p86
      %p88 = scmp.ne.s32.totalorder %s76, %s77
      %p89 = scmp.eq.s32.totalorder %s25, 1
      %p90 = por %p88, %p89
      %p92 = scmp.ne.s32.totalorder %s77, %s91
      %p93 = scmp.eq.s32.totalorder %s25, 0
      %p94 = por %p92, %p93
      %s96 = sadd.s32 %s95, 1
      %p99 = scmp.eq.s32.totalorder %s19, 1
      %p100 = scmp.ne.s32.totalorder %s95, %s97
      %p101 = scmp.eq.s32.totalorder %s19, 0
      %p102 = por %p100, %p101
      %p103 = scmp.ne.s32.totalorder %s95, %s97
      %p104 = scmp.eq.s32.totalorder %s24, 1
      %p105 = por %p103, %p104
      %p106 = scmp.ne.s32.totalorder %s97, %s98
      %p107 = scmp.eq.s32.totalorder %s24, 0
      %p108 = por %p106, %p107
      %p109 = scmp.ne.s32.totalorder %s97, %s98
      %p110 = scmp.eq.s32.totalorder %s25, 1
      %p111 = por %p109, %p110
      %p113 = scmp.ne.s32.totalorder %s98, %s112
      %p114 = scmp.eq.s32.totalorder %s25, 0
      %p115 = por %p113, %p114
      %s116 = ssub.s32 %s19, %s26
      %p117 = scmp.eq.s32.totalorder %s116, 0
      %s119 = sadd.s32 %s118, 1
      %s120 = scalar_select %p117, %s118, %s119
      %p123 = pneg %p117
      %p124 = scmp.eq.s32.totalorder %s19, 1
      %p125 = por %p123, %p124
      %p126 = scmp.ne.s32.totalorder %s118, %s121
      %p127 = scmp.eq.s32.totalorder %s19, 0
      %p128 = por %p126, %p127
      %p129 = scmp.ne.s32.totalorder %s118, %s121
      %p130 = scmp.eq.s32.totalorder %s24, 1
      %p131 = por %p129, %p130
      %p132 = scmp.ne.s32.totalorder %s121, %s122
      %p133 = scmp.eq.s32.totalorder %s24, 0
      %p134 = por %p132, %p133
      %p135 = scmp.ne.s32.totalorder %s121, %s122
      %p136 = scmp.eq.s32.totalorder %s25, 1
      %p137 = por %p135, %p136
      %p139 = scmp.ne.s32.totalorder %s122, %s138
      %p140 = scmp.eq.s32.totalorder %s25, 0
      %p141 = por %p139, %p140
      %p142 = scmp.le.s32.totalorder 1, %s19
      %p143 = scmp.lt.s32.totalorder %s19, 3
      %p144 = pnand %p142, %p143
      %p145 = pneg %p144
      // Predicated region
      $region9: #{tpu_custom_call.1} parent=5 // pred_check
        _
      $region10: #{tpu_custom_call.1} parent=5 // pred_check_branch
        %147 = sbr.rel (%p144) target = $region12
      $region11: #{tpu_custom_call.1} parent=5 // pred_region
        %s148 = ssub.s32 %s19, 1
        // Predicated region
        $region13: #{tpu_custom_call.1} parent=11 // pred_check
          %p149 = pneg %p66
        $region14: #{tpu_custom_call.1} parent=11 // pred_check_branch
          %151 = sbr.rel (%p149) target = $region16
        $region15: #{tpu_custom_call.1} parent=11 // pred_region
          %s153 = ssub.s32 16, 16
          %154 = vsyncadd [#allocation7], %s153
          %s156 = sshll.u32 %s1, 4
          %s157 = int_to_ptr.vmem [resolvable:$true] %s156
          %159 = dma.vmem_to_smem %s157, 16, [#allocation8], [#allocation7]
        $region16: #{tpu_custom_call.1} parent=11 // pred_fallthru
          _
        // Predicated region
        $region17: #{tpu_custom_call.1} parent=11 // pred_check
          %p160 = pneg %p87
        $region18: #{tpu_custom_call.1} parent=11 // pred_check_branch
          %162 = sbr.rel (%p160) target = $region20
        $region19: #{tpu_custom_call.1} parent=11 // pred_region
          %s164 = ssub.s32 16, 16
          %165 = vsyncadd [#allocation10], %s164
          %s167 = sshll.u32 %s2, 4
          %s168 = int_to_ptr.vmem [resolvable:$true] %s167
          %170 = dma.vmem_to_smem %s168, 16, [#allocation9], [#allocation10]
        $region20: #{tpu_custom_call.1} parent=11 // pred_fallthru
          _
        // Predicated region
        $region21: #{tpu_custom_call.1} parent=11 // pred_check
          %p171 = pneg %p108
        $region22: #{tpu_custom_call.1} parent=11 // pred_check_branch
          %173 = sbr.rel (%p171) target = $region24
        $region23: #{tpu_custom_call.1} parent=11 // pred_region
          _
        $region24: #{tpu_custom_call.1} parent=11 // pred_fallthru
          _
      $region12: #{tpu_custom_call.1} parent=5 // pred_fallthru
        _
      %p174 = scmp.lt.s32.totalorder %s19, 2
      // Predicated region
      $region25: #{tpu_custom_call.1} parent=5 // pred_check
        %p175 = pneg %p174
      $region26: #{tpu_custom_call.1} parent=5 // pred_check_branch
        %177 = sbr.rel (%p175) target = $region28
      $region27: #{tpu_custom_call.1} parent=5 // pred_region
        // Predicated region
        $region29: #{tpu_custom_call.1} parent=27 // pred_check
          %p178 = pneg %p39
        $region30: #{tpu_custom_call.1} parent=27 // pred_check_branch
          %180 = sbr.rel (%p178) target = $region32
        $region31: #{tpu_custom_call.1} parent=27 // pred_region
          %s181 = sand.u32 %s29, 1
          %s182 = scalar_lea.sflag [#allocation5], %s181
          %s183 = sand.u32 %s29, 1
          %s184 = smul.addr %s183, 96
          %s185 = scalar_lea.vmem [#allocation4], %s184
          %s186 = smul.u32 2, %s19
          %s188 = ssub.s32 1536, 1536
          %189 = vsyncadd %s182, %s188
          %s190 = smul.addr %s186, 6
          %s191 = smul.addr %s190, 128
          %s192 = scalar_lea.hbm %s0, %s191
          %s193 = sshll.u32 %s185, 4
          %s194 = int_to_ptr.vmem [resolvable:$true] %s193
          %199 = dma.hbm_to_vmem [thread:$0]  %s192, 1536, %s194, %s182, 128, 128, 8
        $region32: #{tpu_custom_call.1} parent=27 // pred_fallthru
          _
      $region28: #{tpu_custom_call.1} parent=5 // pred_fallthru
        _
      %p200 = scmp.le.s32.totalorder 1, %s19
      %p201 = scmp.lt.s32.totalorder %s19, 3
      %p202 = pnand %p200, %p201
      %p203 = pneg %p202
      // Predicated region
      $region33: #{tpu_custom_call.1} parent=5 // pred_check
        _
      $region34: #{tpu_custom_call.1} parent=5 // pred_check_branch
        %205 = sbr.rel (%p202) target = $region36
      $region35: #{tpu_custom_call.1} parent=5 // pred_region
        %s206 = ssub.s32 %s19, 1
        %s207 = sand.u32 %s32, 1
        %s208 = scalar_lea.sflag [#allocation5], %s207
        %s209 = sand.u32 %s32, 1
        %s210 = smul.addr %s209, 96
        %s211 = scalar_lea.vmem [#allocation4], %s210
        // Predicated region
        $region37: #{tpu_custom_call.1} parent=35 // pred_check
          %p212 = pneg %p45
        $region38: #{tpu_custom_call.1} parent=35 // pred_check_branch
          %214 = sbr.rel (%p212) target = $region40
        $region39: #{tpu_custom_call.1} parent=35 // pred_region
          %215 = dma.done %s208, 1536
        $region40: #{tpu_custom_call.1} parent=35 // pred_fallthru
          _
        // Predicated region
        $region41: #{tpu_custom_call.1} parent=35 // pred_check
          %p216 = pneg %p66
        $region42: #{tpu_custom_call.1} parent=35 // pred_check_branch
          %218 = sbr.rel (%p216) target = $region44
        $region43: #{tpu_custom_call.1} parent=35 // pred_region
          %219 = dma.done [#allocation7], 16
        $region44: #{tpu_custom_call.1} parent=35 // pred_fallthru
          _
        // Predicated region
        $region45: #{tpu_custom_call.1} parent=35 // pred_check
          %p220 = pneg %p87
        $region46: #{tpu_custom_call.1} parent=35 // pred_check_branch
          %222 = sbr.rel (%p220) target = $region48
        $region47: #{tpu_custom_call.1} parent=35 // pred_region
          %223 = dma.done [#allocation10], 16
        $region48: #{tpu_custom_call.1} parent=35 // pred_fallthru
          _
        %224 = sfence
        %s225 = sand.u32 %s32, 1
        %s226 = scalar_lea.sflag [#allocation5], %s225
        %s227 = sand.u32 %s32, 1
        %s228 = smul.addr %s227, 96
        %s229 = scalar_lea.vmem [#allocation4], %s228
        %p230 = pneg %p45
        %p231 = pneg %p42
        %p232 = pneg %p66
        %p233 = pneg %p63
        %p234 = pneg %p87
        %p235 = pneg %p84
        %p236 = pneg %p108
        %p237 = pneg %p105
        %p238 = pneg %p134
        %p239 = pneg %p131
        %s240 = sand.u32 %s121, 1
        %s241 = scalar_lea.sflag [#allocation6], %s240
        %s242 = sand.u32 %s121, 1
        %s243 = smul.addr %s242, 192
        %s244 = scalar_lea.vmem [#allocation11], %s243
        %s245 = smul.u32 2, %s24
        %s246 = smul.u32 2, %s24
        %247 = vst [vmem:[#allocation2] sm:$0xff] 0.0
        %vm248 = vcmask 31744
        %249 = vst.msk [vmem:[#allocation2 + $0x8] sm:$0xff] %vm248, 0.0
        %250 = vst [vmem:[#allocation2 + $0x10] sm:$0xff] 0.0
        %251 = vst.msk [vmem:[#allocation2 + $0x18] sm:$0xff] %vm248, 0.0
        %252 = vst [vmem:[#allocation2 + $0x20] sm:$0xf] 0.0
        %vm253 = vcmask 27648
        %254 = vst.msk [vmem:[#allocation2 + $0x28] sm:$0xf] %vm253, 0.0
        %255 = vst [vmem:[#allocation2 + $0x30] sm:$0xff] 0.0
        %256 = vst.msk [vmem:[#allocation2 + $0x38] sm:$0xff] %vm248, 0.0
        %257 = vst [vmem:[#allocation2 + $0x40] sm:$0xff] 0.0
        %258 = vst.msk [vmem:[#allocation2 + $0x48] sm:$0xff] %vm248, 0.0
        %259 = vst [vmem:[#allocation2 + $0x50] sm:$0xf] 0.0
        %260 = vst.msk [vmem:[#allocation2 + $0x58] sm:$0xf] %vm253, 0.0
        %v261 = vld [vmem:[%s211] sm:$0xff]
        %v262 = vld [vmem:[%s211 + $0x8] sm:$0xff]
        %v263 = vld [vmem:[%s211 + $0x10] sm:$0xff]
        %v264 = vld [vmem:[%s211 + $0x18] sm:$0xff]
        %v265 = vld [vmem:[%s211 + $0x20] sm:$0xff]
        %v266 = vld [vmem:[%s211 + $0x28] sm:$0xff]
        %v267 = vld [vmem:[%s211 + $0x30] sm:$0xff]
        %v268 = vld [vmem:[%s211 + $0x38] sm:$0xff]
        %v269 = vld [vmem:[%s211 + $0x40] sm:$0xff]
        %v270 = vld [vmem:[%s211 + $0x48] sm:$0xff]
        %v271 = vld [vmem:[%s211 + $0x50] sm:$0xff]
        %v272 = vld [vmem:[%s211 + $0x58] sm:$0xff]
        %v273 = vadd.f32 %v261, %v263
        %v274 = vadd.f32 %v273, %v265
        %v275 = vadd.f32 %v262, %v264
        %v276 = vadd.f32 %v275, %v266
        %v277 = vadd.f32 %v267, %v269
        %v278 = vadd.f32 %v277, %v271
        %v279 = vadd.f32 %v268, %v270
        %v280 = vadd.f32 %v279, %v272
        %vm285 = vcmask 1041408
        %v286 = vrot.slane %v274, 6
        %v287 = vrot.slane %v276, 6
        %v288 = vsel %vm285, %v286, %v287
        %v289 = vrot.slane %v278, 6
        %v290 = vrot.slane %v280, 6
        %v291 = vsel %vm285, %v289, %v290
        %292 = vrot.lane.b32.xlu0 %v286, 2
        %v293 = vpop.permute.xlu0 %292
        %294 = vrot.lane.b32.xlu0 %v288, 2
        %v295 = vpop.permute.xlu0 %294
        %296 = vrot.lane.b32.xlu0 %v287, 2
        %v297 = vpop.permute.xlu0 %296
        %298 = vrot.lane.b32.xlu0 %v289, 2
        %v299 = vpop.permute.xlu0 %298
        %300 = vrot.lane.b32.xlu0 %v291, 2
        %v301 = vpop.permute.xlu0 %300
        %302 = vrot.lane.b32.xlu0 %v290, 2
        %v303 = vpop.permute.xlu0 %302
        %vm310 = vcmask 1047570
        %311 = vst.msk [vmem:[#allocation2] sm:$0xfc] %vm310, %v293
        %vm312 = vcmask 15362
        %313 = vst.msk [vmem:[#allocation2 + $0x8] sm:$0xfc] %vm312, %v293
        %vm314 = vcmask 1047568
        %315 = vst.msk [vmem:[#allocation2 + $0x10] sm:$0xff] %vm314, %v295
        %vm316 = vcmask 15360
        %317 = vst.msk [vmem:[#allocation2 + $0x18] sm:$0xff] %vm316, %v295
        %vm318 = vcmask 1041424
        %319 = vst.msk [vmem:[#allocation2 + $0x20] sm:$0x3] %vm318, %v297
        %vm320 = vcmask 9216
        %321 = vst.msk [vmem:[#allocation2 + $0x28] sm:$0x3] %vm320, %v297
        %322 = vst.msk [vmem:[#allocation2 + $0x30] sm:$0xfc] %vm310, %v299
        %323 = vst.msk [vmem:[#allocation2 + $0x38] sm:$0xfc] %vm312, %v299
        %324 = vst.msk [vmem:[#allocation2 + $0x40] sm:$0xff] %vm314, %v301
        %325 = vst.msk [vmem:[#allocation2 + $0x48] sm:$0xff] %vm316, %v301
        %326 = vst.msk [vmem:[#allocation2 + $0x50] sm:$0x3] %vm318, %v303
        %327 = vst.msk [vmem:[#allocation2 + $0x58] sm:$0x3] %vm320, %v303
        %v328 = vld [vmem:[#allocation2] sm:$0xff]
        %v329 = vld [vmem:[#allocation2 + $0x10] sm:$0xff]
        %v330 = vld [vmem:[#allocation2 + $0x30] sm:$0xff]
        %v331 = vld [vmem:[#allocation2 + $0x40] sm:$0xff]
        %v332 = vmul.f32 %v328, -0.083333336
        %v333 = vmul.f32 %v329, -0.083333336
        %v334 = vmul.f32 %v330, -0.083333336
        %v335 = vmul.f32 %v331, -0.083333336
        %v336 = vld [vmem:[#allocation2 + $0x8] sm:$0xff]
        %v337 = vld [vmem:[#allocation2 + $0x18] sm:$0xff]
        %v338 = vld [vmem:[#allocation2 + $0x38] sm:$0xff]
        %v339 = vld [vmem:[#allocation2 + $0x48] sm:$0xff]
        %v340 = vmul.f32 %v328, 0.16666667
        %v341 = vmul.f32 %v336, 0.16666667
        %v342 = vmul.f32 %v329, 0.16666667
        %v343 = vmul.f32 %v337, 0.16666667
        %v344 = vmul.f32 %v330, 0.16666667
        %v345 = vmul.f32 %v338, 0.16666667
        %v346 = vmul.f32 %v331, 0.16666667
        %v347 = vmul.f32 %v339, 0.16666667
        %356 = vrot.lane.b32.xlu0 %v340, 127
        %v357 = vpop.permute.xlu0 %356
        %358 = vrot.lane.b32.xlu0 %v341, 127
        %v359 = vpop.permute.xlu0 %358
        %360 = vrot.lane.b32.xlu0 %v342, 127
        %v361 = vpop.permute.xlu0 %360
        %362 = vrot.lane.b32.xlu0 %v343, 127
        %v363 = vpop.permute.xlu0 %362
        %364 = vrot.lane.b32.xlu0 %v344, 127
        %v365 = vpop.permute.xlu0 %364
        %366 = vrot.lane.b32.xlu0 %v345, 127
        %v367 = vpop.permute.xlu0 %366
        %368 = vrot.lane.b32.xlu0 %v346, 127
        %v369 = vpop.permute.xlu0 %368
        %370 = vrot.lane.b32.xlu0 %v347, 127
        %v371 = vpop.permute.xlu0 %370
        %vm372 = vcmask 1039360
        %v373 = vsel %vm372, %v357, %v359
        %v374 = vsel %vm372, %v361, %v363
        %v375 = vsel %vm372, %v365, %v367
        %v376 = vsel %vm372, %v369, %v371
        %v381 = vadd.f32 %v332, %v373
        %v382 = vadd.f32 %v333, %v374
        %v383 = vadd.f32 %v334, %v375
        %v384 = vadd.f32 %v335, %v376
        %v385 = vmul.f32 %v328, -0.16666667
        %v386 = vmul.f32 %v336, -0.16666667
        %v387 = vmul.f32 %v329, -0.16666667
        %v388 = vmul.f32 %v337, -0.16666667
        %v389 = vmul.f32 %v330, -0.16666667
        %v390 = vmul.f32 %v338, -0.16666667
        %v391 = vmul.f32 %v331, -0.16666667
        %v392 = vmul.f32 %v339, -0.16666667
        %401 = vrot.lane.b32.xlu0 %v385, 126
        %v402 = vpop.permute.xlu0 %401
        %403 = vrot.lane.b32.xlu0 %v386, 126
        %v404 = vpop.permute.xlu0 %403
        %405 = vrot.lane.b32.xlu0 %v387, 126
        %v406 = vpop.permute.xlu0 %405
        %407 = vrot.lane.b32.xlu0 %v388, 126
        %v408 = vpop.permute.xlu0 %407
        %409 = vrot.lane.b32.xlu0 %v389, 126
        %v410 = vpop.permute.xlu0 %409
        %411 = vrot.lane.b32.xlu0 %v390, 126
        %v412 = vpop.permute.xlu0 %411
        %413 = vrot.lane.b32.xlu0 %v391, 126
        %v414 = vpop.permute.xlu0 %413
        %415 = vrot.lane.b32.xlu0 %v392, 126
        %v416 = vpop.permute.xlu0 %415
        %vm417 = vcmask 1031168
        %v418 = vsel %vm417, %v402, %v404
        %v419 = vsel %vm417, %v406, %v408
        %v420 = vsel %vm417, %v410, %v412
        %v421 = vsel %vm417, %v414, %v416
        %v426 = vadd.f32 %v381, %v418
        %v427 = vadd.f32 %v382, %v419
        %v428 = vadd.f32 %v383, %v420
        %v429 = vadd.f32 %v384, %v421
        %430 = vrot.lane.b32.xlu0 %v340, 125
        %v431 = vpop.permute.xlu0 %430
        %432 = vrot.lane.b32.xlu0 %v341, 125
        %v433 = vpop.permute.xlu0 %432
        %434 = vrot.lane.b32.xlu0 %v342, 125
        %v435 = vpop.permute.xlu0 %434
        %436 = vrot.lane.b32.xlu0 %v343, 125
        %v437 = vpop.permute.xlu0 %436
        %438 = vrot.lane.b32.xlu0 %v344, 125
        %v439 = vpop.permute.xlu0 %438
        %440 = vrot.lane.b32.xlu0 %v345, 125
        %v441 = vpop.permute.xlu0 %440
        %442 = vrot.lane.b32.xlu0 %v346, 125
        %v443 = vpop.permute.xlu0 %442
        %444 = vrot.lane.b32.xlu0 %v347, 125
        %v445 = vpop.permute.xlu0 %444
        %vm446 = vcmask 1022976
        %v447 = vsel %vm446, %v431, %v433
        %v448 = vsel %vm446, %v435, %v437
        %v449 = vsel %vm446, %v439, %v441
        %v450 = vsel %vm446, %v443, %v445
        %v455 = vadd.f32 %v426, %v447
        %v456 = vadd.f32 %v427, %v448
        %v457 = vadd.f32 %v428, %v449
        %v458 = vadd.f32 %v429, %v450
        %v459 = vmul.f32 %v336, -0.083333336
        %v460 = vmul.f32 %v337, -0.083333336
        %v461 = vmul.f32 %v338, -0.083333336
        %v462 = vmul.f32 %v339, -0.083333336
        %471 = vrot.lane.b32.xlu0 %v332, 124
        %v472 = vpop.permute.xlu0 %471
        %473 = vrot.lane.b32.xlu0 %v459, 124
        %v474 = vpop.permute.xlu0 %473
        %475 = vrot.lane.b32.xlu0 %v333, 124
        %v476 = vpop.permute.xlu0 %475
        %477 = vrot.lane.b32.xlu0 %v460, 124
        %v478 = vpop.permute.xlu0 %477
        %479 = vrot.lane.b32.xlu0 %v334, 124
        %v480 = vpop.permute.xlu0 %479
        %481 = vrot.lane.b32.xlu0 %v461, 124
        %v482 = vpop.permute.xlu0 %481
        %483 = vrot.lane.b32.xlu0 %v335, 124
        %v484 = vpop.permute.xlu0 %483
        %485 = vrot.lane.b32.xlu0 %v462, 124
        %v486 = vpop.permute.xlu0 %485
        %vm487 = vcmask 1014784
        %v488 = vsel %vm487, %v472, %v474
        %v489 = vsel %vm487, %v476, %v478
        %v490 = vsel %vm487, %v480, %v482
        %v491 = vsel %vm487, %v484, %v486
        %v496 = vadd.f32 %v455, %v488
        %v497 = vadd.f32 %v456, %v489
        %v498 = vadd.f32 %v457, %v490
        %v499 = vadd.f32 %v458, %v491
        %v500 = vld [vmem:[#allocation2] sm:$0xfe]
        %v501 = vld [vmem:[#allocation2 + $0x20] sm:$0x1]
        %v502 = vld [vmem:[#allocation2 + $0x30] sm:$0xfe]
        %v503 = vld [vmem:[#allocation2 + $0x50] sm:$0x1]
        %v504 = vmul.f32 %v500, 0.16666667
        %v505 = vmul.f32 %v501, 0.16666667
        %v506 = vmul.f32 %v502, 0.16666667
        %v507 = vmul.f32 %v503, 0.16666667
        %vm512 = vcmask 1046528
        %v513 = vrot.slane %v504, 1
        %v514 = vrot.slane %v342, 1
        %v515 = vsel %vm512, %v513, %v514
        %v516 = vrot.slane %v505, 1
        %v517 = vsel %vm512, %v514, %v516
        %v518 = vrot.slane %v506, 1
        %v519 = vrot.slane %v346, 1
        %v520 = vsel %vm512, %v518, %v519
        %v521 = vrot.slane %v507, 1
        %v522 = vsel %vm512, %v519, %v521
        %v527 = vadd.f32 %v496, %v515
        %v528 = vadd.f32 %v497, %v517
        %v529 = vadd.f32 %v498, %v520
        %v530 = vadd.f32 %v499, %v522
        %v531 = vld [vmem:[#allocation2 + $0x8] sm:$0xfe]
        %v532 = vld [vmem:[#allocation2 + $0x28] sm:$0x1]
        %v533 = vld [vmem:[#allocation2 + $0x38] sm:$0xfe]
        %v534 = vld [vmem:[#allocation2 + $0x58] sm:$0x1]
        %v535 = vmul.f32 %v500, -0.25
        %v536 = vmul.f32 %v531, -0.25
        %v537 = vmul.f32 %v329, -0.25
        %v538 = vmul.f32 %v337, -0.25
        %v539 = vmul.f32 %v501, -0.25
        %v540 = vmul.f32 %v532, -0.25
        %v541 = vmul.f32 %v502, -0.25
        %v542 = vmul.f32 %v533, -0.25
        %v543 = vmul.f32 %v331, -0.25
        %v544 = vmul.f32 %v339, -0.25
        %v545 = vmul.f32 %v503, -0.25
        %v546 = vmul.f32 %v534, -0.25
        %v547 = vmul.f32 %v500, 0.5
        %v548 = vmul.f32 %v531, 0.5
        %v549 = vmul.f32 %v329, 0.5
        %v550 = vmul.f32 %v337, 0.5
        %v551 = vmul.f32 %v501, 0.5
        %v552 = vmul.f32 %v532, 0.5
        %v553 = vmul.f32 %v502, 0.5
        %v554 = vmul.f32 %v533, 0.5
        %v555 = vmul.f32 %v331, 0.5
        %v556 = vmul.f32 %v339, 0.5
        %v557 = vmul.f32 %v503, 0.5
        %v558 = vmul.f32 %v534, 0.5
        %v559 = vmul.f32 %v500, -0.5
        %v560 = vmul.f32 %v531, -0.5
        %v561 = vmul.f32 %v329, -0.5
        %v562 = vmul.f32 %v337, -0.5
        %v563 = vmul.f32 %v501, -0.5
        %v564 = vmul.f32 %v532, -0.5
        %v565 = vmul.f32 %v502, -0.5
        %v566 = vmul.f32 %v533, -0.5
        %v567 = vmul.f32 %v331, -0.5
        %v568 = vmul.f32 %v339, -0.5
        %v569 = vmul.f32 %v503, -0.5
        %v570 = vmul.f32 %v534, -0.5
        %v583 = vrot.slane %v559, 1
        %v584 = vrot.slane %v561, 1
        %v585 = vsel %vm512, %v583, %v584
        %v586 = vrot.slane %v560, 1
        %v587 = vrot.slane %v562, 1
        %v588 = vsel %vm512, %v586, %v587
        %v589 = vrot.slane %v563, 1
        %v590 = vsel %vm512, %v584, %v589
        %v591 = vrot.slane %v564, 1
        %v592 = vsel %vm512, %v587, %v591
        %v593 = vrot.slane %v565, 1
        %v594 = vrot.slane %v567, 1
        %v595 = vsel %vm512, %v593, %v594
        %v596 = vrot.slane %v566, 1
        %v597 = vrot.slane %v568, 1
        %v598 = vsel %vm512, %v596, %v597
        %v599 = vrot.slane %v569, 1
        %v600 = vsel %vm512, %v594, %v599
        %v601 = vrot.slane %v570, 1
        %v602 = vsel %vm512, %v597, %v601
        %603 = vrot.lane.b32.xlu0 %v585, 127
        %v604 = vpop.permute.xlu0 %603
        %605 = vrot.lane.b32.xlu0 %v588, 127
        %v606 = vpop.permute.xlu0 %605
        %607 = vrot.lane.b32.xlu0 %v590, 127
        %v608 = vpop.permute.xlu0 %607
        %609 = vrot.lane.b32.xlu0 %v592, 127
        %v610 = vpop.permute.xlu0 %609
        %611 = vrot.lane.b32.xlu0 %v595, 127
        %v612 = vpop.permute.xlu0 %611
        %613 = vrot.lane.b32.xlu0 %v598, 127
        %v614 = vpop.permute.xlu0 %613
        %615 = vrot.lane.b32.xlu0 %v600, 127
        %v616 = vpop.permute.xlu0 %615
        %617 = vrot.lane.b32.xlu0 %v602, 127
        %v618 = vpop.permute.xlu0 %617
        %v619 = vsel %vm372, %v604, %v606
        %v620 = vsel %vm372, %v608, %v610
        %v621 = vsel %vm372, %v612, %v614
        %v622 = vsel %vm372, %v616, %v618
        %v627 = vadd.f32 %v527, %v619
        %v628 = vadd.f32 %v528, %v620
        %v629 = vadd.f32 %v529, %v621
        %v630 = vadd.f32 %v530, %v622
        %643 = vrot.lane.b32.xlu0 %v547, 127
        %v644 = vpop.permute.xlu0 %643
        %645 = vrot.lane.b32.xlu0 %v548, 127
        %v646 = vpop.permute.xlu0 %645
        %647 = vrot.lane.b32.xlu0 %v549, 127
        %v648 = vpop.permute.xlu0 %647
        %649 = vrot.lane.b32.xlu0 %v550, 127
        %v650 = vpop.permute.xlu0 %649
        %651 = vrot.lane.b32.xlu0 %v551, 127
        %v652 = vpop.permute.xlu0 %651
        %653 = vrot.lane.b32.xlu0 %v552, 127
        %v654 = vpop.permute.xlu0 %653
        %655 = vrot.lane.b32.xlu0 %v553, 127
        %v656 = vpop.permute.xlu0 %655
        %657 = vrot.lane.b32.xlu0 %v554, 127
        %v658 = vpop.permute.xlu0 %657
        %659 = vrot.lane.b32.xlu0 %v555, 127
        %v660 = vpop.permute.xlu0 %659
        %661 = vrot.lane.b32.xlu0 %v556, 127
        %v662 = vpop.permute.xlu0 %661
        %663 = vrot.lane.b32.xlu0 %v557, 127
        %v664 = vpop.permute.xlu0 %663
        %665 = vrot.lane.b32.xlu0 %v558, 127
        %v666 = vpop.permute.xlu0 %665
        %v667 = vsel %vm372, %v644, %v646
        %v668 = vsel %vm372, %v648, %v650
        %v669 = vsel %vm372, %v652, %v654
        %v670 = vsel %vm372, %v656, %v658
        %v671 = vsel %vm372, %v660, %v662
        %v672 = vsel %vm372, %v664, %v666
        %v685 = vadd.f32 %v535, %v667
        %v686 = vadd.f32 %v536, %v646
        %v687 = vadd.f32 %v537, %v668
        %v688 = vadd.f32 %v538, %v650
        %v689 = vadd.f32 %v539, %v669
        %v690 = vadd.f32 %v540, %v654
        %v691 = vadd.f32 %v541, %v670
        %v692 = vadd.f32 %v542, %v658
        %v693 = vadd.f32 %v543, %v671
        %v694 = vadd.f32 %v544, %v662
        %v695 = vadd.f32 %v545, %v672
        %v696 = vadd.f32 %v546, %v666
        %v697 = vmul.f32 %v500, 0.6666667
        %v698 = vmul.f32 %v531, 0.6666667
        %v699 = vmul.f32 %v329, 0.6666667
        %v700 = vmul.f32 %v337, 0.6666667
        %v701 = vmul.f32 %v501, 0.6666667
        %v702 = vmul.f32 %v532, 0.6666667
        %v703 = vmul.f32 %v502, 0.6666667
        %v704 = vmul.f32 %v533, 0.6666667
        %v705 = vmul.f32 %v331, 0.6666667
        %v706 = vmul.f32 %v339, 0.6666667
        %v707 = vmul.f32 %v503, 0.6666667
        %v708 = vmul.f32 %v534, 0.6666667
        %v721 = vrot.slane %v697, 1
        %v722 = vrot.slane %v699, 1
        %v723 = vsel %vm512, %v721, %v722
        %v724 = vrot.slane %v698, 1
        %v725 = vrot.slane %v700, 1
        %v726 = vsel %vm512, %v724, %v725
        %v727 = vrot.slane %v701, 1
        %v728 = vsel %vm512, %v722, %v727
        %v729 = vrot.slane %v702, 1
        %v730 = vsel %vm512, %v725, %v729
        %v731 = vrot.slane %v703, 1
        %v732 = vrot.slane %v705, 1
        %v733 = vsel %vm512, %v731, %v732
        %v734 = vrot.slane %v704, 1
        %v735 = vrot.slane %v706, 1
        %v736 = vsel %vm512, %v734, %v735
        %v737 = vrot.slane %v707, 1
        %v738 = vsel %vm512, %v732, %v737
        %v739 = vrot.slane %v708, 1
        %v740 = vsel %vm512, %v735, %v739
        %741 = vrot.lane.b32.xlu0 %v723, 126
        %v742 = vpop.permute.xlu0 %741
        %743 = vrot.lane.b32.xlu0 %v726, 126
        %v744 = vpop.permute.xlu0 %743
        %745 = vrot.lane.b32.xlu0 %v728, 126
        %v746 = vpop.permute.xlu0 %745
        %747 = vrot.lane.b32.xlu0 %v730, 126
        %v748 = vpop.permute.xlu0 %747
        %749 = vrot.lane.b32.xlu0 %v733, 126
        %v750 = vpop.permute.xlu0 %749
        %751 = vrot.lane.b32.xlu0 %v736, 126
        %v752 = vpop.permute.xlu0 %751
        %753 = vrot.lane.b32.xlu0 %v738, 126
        %v754 = vpop.permute.xlu0 %753
        %755 = vrot.lane.b32.xlu0 %v740, 126
        %v756 = vpop.permute.xlu0 %755
        %v757 = vsel %vm417, %v742, %v744
        %v758 = vsel %vm417, %v746, %v748
        %v759 = vsel %vm417, %v750, %v752
        %v760 = vsel %vm417, %v754, %v756
        %v765 = vadd.f32 %v627, %v757
        %v766 = vadd.f32 %v628, %v758
        %v767 = vadd.f32 %v629, %v759
        %v768 = vadd.f32 %v630, %v760
        %781 = vrot.lane.b32.xlu0 %v535, 126
        %v782 = vpop.permute.xlu0 %781
        %783 = vrot.lane.b32.xlu0 %v536, 126
        %v784 = vpop.permute.xlu0 %783
        %785 = vrot.lane.b32.xlu0 %v537, 126
        %v786 = vpop.permute.xlu0 %785
        %787 = vrot.lane.b32.xlu0 %v538, 126
        %v788 = vpop.permute.xlu0 %787
        %789 = vrot.lane.b32.xlu0 %v539, 126
        %v790 = vpop.permute.xlu0 %789
        %791 = vrot.lane.b32.xlu0 %v540, 126
        %v792 = vpop.permute.xlu0 %791
        %793 = vrot.lane.b32.xlu0 %v541, 126
        %v794 = vpop.permute.xlu0 %793
        %795 = vrot.lane.b32.xlu0 %v542, 126
        %v796 = vpop.permute.xlu0 %795
        %797 = vrot.lane.b32.xlu0 %v543, 126
        %v798 = vpop.permute.xlu0 %797
        %799 = vrot.lane.b32.xlu0 %v544, 126
        %v800 = vpop.permute.xlu0 %799
        %801 = vrot.lane.b32.xlu0 %v545, 126
        %v802 = vpop.permute.xlu0 %801
        %803 = vrot.lane.b32.xlu0 %v546, 126
        %v804 = vpop.permute.xlu0 %803
        %v805 = vsel %vm417, %v782, %v784
        %v806 = vsel %vm417, %v786, %v788
        %v807 = vsel %vm417, %v790, %v792
        %v808 = vsel %vm417, %v794, %v796
        %v809 = vsel %vm417, %v798, %v800
        %v810 = vsel %vm417, %v802, %v804
        %v823 = vadd.f32 %v685, %v805
        %v824 = vadd.f32 %v686, %v784
        %v825 = vadd.f32 %v687, %v806
        %v826 = vadd.f32 %v688, %v788
        %v827 = vadd.f32 %v689, %v807
        %v828 = vadd.f32 %v690, %v792
        %v829 = vadd.f32 %v691, %v808
        %v830 = vadd.f32 %v692, %v796
        %v831 = vadd.f32 %v693, %v809
        %v832 = vadd.f32 %v694, %v800
        %v833 = vadd.f32 %v695, %v810
        %v834 = vadd.f32 %v696, %v804
        %835 = vrot.lane.b32.xlu0 %v585, 125
        %v836 = vpop.permute.xlu0 %835
        %837 = vrot.lane.b32.xlu0 %v588, 125
        %v838 = vpop.permute.xlu0 %837
        %839 = vrot.lane.b32.xlu0 %v590, 125
        %v840 = vpop.permute.xlu0 %839
        %841 = vrot.lane.b32.xlu0 %v592, 125
        %v842 = vpop.permute.xlu0 %841
        %843 = vrot.lane.b32.xlu0 %v595, 125
        %v844 = vpop.permute.xlu0 %843
        %845 = vrot.lane.b32.xlu0 %v598, 125
        %v846 = vpop.permute.xlu0 %845
        %847 = vrot.lane.b32.xlu0 %v600, 125
        %v848 = vpop.permute.xlu0 %847
        %849 = vrot.lane.b32.xlu0 %v602, 125
        %v850 = vpop.permute.xlu0 %849
        %v851 = vsel %vm446, %v836, %v838
        %v852 = vsel %vm446, %v840, %v842
        %v853 = vsel %vm446, %v844, %v846
        %v854 = vsel %vm446, %v848, %v850
        %v859 = vadd.f32 %v765, %v851
        %v860 = vadd.f32 %v766, %v852
        %v861 = vadd.f32 %v767, %v853
        %v862 = vadd.f32 %v768, %v854
        %v863 = vmul.f32 %v531, 0.16666667
        %v864 = vmul.f32 %v532, 0.16666667
        %v865 = vmul.f32 %v533, 0.16666667
        %v866 = vmul.f32 %v534, 0.16666667
        %v871 = vrot.slane %v863, 1
        %v872 = vrot.slane %v343, 1
        %v873 = vsel %vm512, %v871, %v872
        %v874 = vrot.slane %v864, 1
        %v875 = vsel %vm512, %v872, %v874
        %v876 = vrot.slane %v865, 1
        %v877 = vrot.slane %v347, 1
        %v878 = vsel %vm512, %v876, %v877
        %v879 = vrot.slane %v866, 1
        %v880 = vsel %vm512, %v877, %v879
        %881 = vrot.lane.b32.xlu0 %v515, 124
        %v882 = vpop.permute.xlu0 %881
        %883 = vrot.lane.b32.xlu0 %v873, 124
        %v884 = vpop.permute.xlu0 %883
        %885 = vrot.lane.b32.xlu0 %v517, 124
        %v886 = vpop.permute.xlu0 %885
        %887 = vrot.lane.b32.xlu0 %v875, 124
        %v888 = vpop.permute.xlu0 %887
        %889 = vrot.lane.b32.xlu0 %v520, 124
        %v890 = vpop.permute.xlu0 %889
        %891 = vrot.lane.b32.xlu0 %v878, 124
        %v892 = vpop.permute.xlu0 %891
        %893 = vrot.lane.b32.xlu0 %v522, 124
        %v894 = vpop.permute.xlu0 %893
        %895 = vrot.lane.b32.xlu0 %v880, 124
        %v896 = vpop.permute.xlu0 %895
        %v897 = vsel %vm487, %v882, %v884
        %v898 = vsel %vm487, %v886, %v888
        %v899 = vsel %vm487, %v890, %v892
        %v900 = vsel %vm487, %v894, %v896
        %v905 = vadd.f32 %v859, %v897
        %v906 = vadd.f32 %v860, %v898
        %v907 = vadd.f32 %v861, %v899
        %v908 = vadd.f32 %v862, %v900
        %v909 = vld [vmem:[#allocation2] sm:$0xfc]
        %v910 = vld [vmem:[#allocation2 + $0x20] sm:$0x3]
        %v911 = vld [vmem:[#allocation2 + $0x30] sm:$0xfc]
        %v912 = vld [vmem:[#allocation2 + $0x50] sm:$0x3]
        %v913 = vmul.f32 %v909, -0.16666667
        %v914 = vmul.f32 %v910, -0.16666667
        %v915 = vmul.f32 %v911, -0.16666667
        %v916 = vmul.f32 %v912, -0.16666667
        %vm921 = vcmask 1045504
        %v922 = vrot.slane %v913, 2
        %v923 = vrot.slane %v387, 2
        %v924 = vsel %vm921, %v922, %v923
        %v925 = vrot.slane %v914, 2
        %v926 = vsel %vm921, %v923, %v925
        %v927 = vrot.slane %v915, 2
        %v928 = vrot.slane %v391, 2
        %v929 = vsel %vm921, %v927, %v928
        %v930 = vrot.slane %v916, 2
        %v931 = vsel %vm921, %v928, %v930
        %v936 = vadd.f32 %v905, %v924
        %v937 = vadd.f32 %v906, %v926
        %v938 = vadd.f32 %v907, %v929
        %v939 = vadd.f32 %v908, %v931
        %v940 = vld [vmem:[#allocation2 + $0x8] sm:$0xfc]
        %v941 = vld [vmem:[#allocation2 + $0x28] sm:$0x3]
        %v942 = vld [vmem:[#allocation2 + $0x38] sm:$0xfc]
        %v943 = vld [vmem:[#allocation2 + $0x58] sm:$0x3]
        %v944 = vmul.f32 %v909, 0.5
        %v945 = vmul.f32 %v940, 0.5
        %v946 = vmul.f32 %v910, 0.5
        %v947 = vmul.f32 %v941, 0.5
        %v948 = vmul.f32 %v911, 0.5
        %v949 = vmul.f32 %v942, 0.5
        %v950 = vmul.f32 %v912, 0.5
        %v951 = vmul.f32 %v943, 0.5
        %v960 = vrot.slane %v944, 1
        %v961 = vrot.slane %v549, 1
        %v962 = vsel %vm512, %v960, %v961
        %v963 = vrot.slane %v945, 1
        %v964 = vrot.slane %v550, 1
        %v965 = vsel %vm512, %v963, %v964
        %v966 = vrot.slane %v946, 1
        %v967 = vsel %vm512, %v961, %v966
        %v968 = vrot.slane %v947, 1
        %v969 = vsel %vm512, %v964, %v968
        %v970 = vrot.slane %v948, 1
        %v971 = vrot.slane %v555, 1
        %v972 = vsel %vm512, %v970, %v971
        %v973 = vrot.slane %v949, 1
        %v974 = vrot.slane %v556, 1
        %v975 = vsel %vm512, %v973, %v974
        %v976 = vrot.slane %v950, 1
        %v977 = vsel %vm512, %v971, %v976
        %v978 = vrot.slane %v951, 1
        %v979 = vsel %vm512, %v974, %v978
        %v992 = vadd.f32 %v823, %v962
        %v993 = vadd.f32 %v824, %v965
        %v994 = vadd.f32 %v825, %v967
        %v995 = vadd.f32 %v826, %v969
        %v996 = vadd.f32 %v827, %v966
        %v997 = vadd.f32 %v828, %v968
        %v998 = vadd.f32 %v829, %v972
        %v999 = vadd.f32 %v830, %v975
        %v1000 = vadd.f32 %v831, %v977
        %v1001 = vadd.f32 %v832, %v979
        %v1002 = vadd.f32 %v833, %v976
        %v1003 = vadd.f32 %v834, %v978
        %v1004 = vmul.f32 %v909, 0.6666667
        %v1005 = vmul.f32 %v940, 0.6666667
        %v1006 = vmul.f32 %v910, 0.6666667
        %v1007 = vmul.f32 %v941, 0.6666667
        %v1008 = vmul.f32 %v911, 0.6666667
        %v1009 = vmul.f32 %v942, 0.6666667
        %v1010 = vmul.f32 %v912, 0.6666667
        %v1011 = vmul.f32 %v943, 0.6666667
        %v1020 = vrot.slane %v1004, 2
        %v1021 = vrot.slane %v699, 2
        %v1022 = vsel %vm921, %v1020, %v1021
        %v1023 = vrot.slane %v1005, 2
        %v1024 = vrot.slane %v700, 2
        %v1025 = vsel %vm921, %v1023, %v1024
        %v1026 = vrot.slane %v1006, 2
        %v1027 = vsel %vm921, %v1021, %v1026
        %v1028 = vrot.slane %v1007, 2
        %v1029 = vsel %vm921, %v1024, %v1028
        %v1030 = vrot.slane %v1008, 2
        %v1031 = vrot.slane %v705, 2
        %v1032 = vsel %vm921, %v1030, %v1031
        %v1033 = vrot.slane %v1009, 2
        %v1034 = vrot.slane %v706, 2
        %v1035 = vsel %vm921, %v1033, %v1034
        %v1036 = vrot.slane %v1010, 2
        %v1037 = vsel %vm921, %v1031, %v1036
        %v1038 = vrot.slane %v1011, 2
        %v1039 = vsel %vm921, %v1034, %v1038
        %1040 = vrot.lane.b32.xlu0 %v1022, 127
        %v1041 = vpop.permute.xlu0 %1040
        %1042 = vrot.lane.b32.xlu0 %v1025, 127
        %v1043 = vpop.permute.xlu0 %1042
        %1044 = vrot.lane.b32.xlu0 %v1027, 127
        %v1045 = vpop.permute.xlu0 %1044
        %1046 = vrot.lane.b32.xlu0 %v1029, 127
        %v1047 = vpop.permute.xlu0 %1046
        %1048 = vrot.lane.b32.xlu0 %v1032, 127
        %v1049 = vpop.permute.xlu0 %1048
        %1050 = vrot.lane.b32.xlu0 %v1035, 127
        %v1051 = vpop.permute.xlu0 %1050
        %1052 = vrot.lane.b32.xlu0 %v1037, 127
        %v1053 = vpop.permute.xlu0 %1052
        %1054 = vrot.lane.b32.xlu0 %v1039, 127
        %v1055 = vpop.permute.xlu0 %1054
        %v1056 = vsel %vm372, %v1041, %v1043
        %v1057 = vsel %vm372, %v1045, %v1047
        %v1058 = vsel %vm372, %v1049, %v1051
        %v1059 = vsel %vm372, %v1053, %v1055
        %v1064 = vadd.f32 %v936, %v1056
        %v1065 = vadd.f32 %v937, %v1057
        %v1066 = vadd.f32 %v938, %v1058
        %v1067 = vadd.f32 %v939, %v1059
        %v1068 = vmul.f32 %v909, -1.0
        %v1069 = vmul.f32 %v940, -1.0
        %v1070 = vmul.f32 %v329, -1.0
        %v1071 = vmul.f32 %v337, -1.0
        %v1072 = vmul.f32 %v910, -1.0
        %v1073 = vmul.f32 %v941, -1.0
        %v1074 = vmul.f32 %v911, -1.0
        %v1075 = vmul.f32 %v942, -1.0
        %v1076 = vmul.f32 %v331, -1.0
        %v1077 = vmul.f32 %v339, -1.0
        %v1078 = vmul.f32 %v912, -1.0
        %v1079 = vmul.f32 %v943, -1.0
        %v1092 = vrot.slane %v1068, 1
        %v1093 = vrot.slane %v1070, 1
        %v1094 = vsel %vm512, %v1092, %v1093
        %v1095 = vrot.slane %v1069, 1
        %v1096 = vrot.slane %v1071, 1
        %v1097 = vsel %vm512, %v1095, %v1096
        %v1098 = vrot.slane %v1072, 1
        %v1099 = vsel %vm512, %v1093, %v1098
        %v1100 = vrot.slane %v1073, 1
        %v1101 = vsel %vm512, %v1096, %v1100
        %v1102 = vrot.slane %v1074, 1
        %v1103 = vrot.slane %v1076, 1
        %v1104 = vsel %vm512, %v1102, %v1103
        %v1105 = vrot.slane %v1075, 1
        %v1106 = vrot.slane %v1077, 1
        %v1107 = vsel %vm512, %v1105, %v1106
        %v1108 = vrot.slane %v1078, 1
        %v1109 = vsel %vm512, %v1103, %v1108
        %v1110 = vrot.slane %v1079, 1
        %v1111 = vsel %vm512, %v1106, %v1110
        %1112 = vrot.lane.b32.xlu0 %v1094, 127
        %v1113 = vpop.permute.xlu0 %1112
        %1114 = vrot.lane.b32.xlu0 %v1097, 127
        %v1115 = vpop.permute.xlu0 %1114
        %1116 = vrot.lane.b32.xlu0 %v1099, 127
        %v1117 = vpop.permute.xlu0 %1116
        %1118 = vrot.lane.b32.xlu0 %v1101, 127
        %v1119 = vpop.permute.xlu0 %1118
        %1120 = vrot.lane.b32.xlu0 %v1098, 127
        %v1121 = vpop.permute.xlu0 %1120
        %1122 = vrot.lane.b32.xlu0 %v1100, 127
        %v1123 = vpop.permute.xlu0 %1122
        %1124 = vrot.lane.b32.xlu0 %v1104, 127
        %v1125 = vpop.permute.xlu0 %1124
        %1126 = vrot.lane.b32.xlu0 %v1107, 127
        %v1127 = vpop.permute.xlu0 %1126
        %1128 = vrot.lane.b32.xlu0 %v1109, 127
        %v1129 = vpop.permute.xlu0 %1128
        %1130 = vrot.lane.b32.xlu0 %v1111, 127
        %v1131 = vpop.permute.xlu0 %1130
        %1132 = vrot.lane.b32.xlu0 %v1108, 127
        %v1133 = vpop.permute.xlu0 %1132
        %1134 = vrot.lane.b32.xlu0 %v1110, 127
        %v1135 = vpop.permute.xlu0 %1134
        %v1136 = vsel %vm372, %v1113, %v1115
        %v1137 = vsel %vm372, %v1117, %v1119
        %v1138 = vsel %vm372, %v1121, %v1123
        %v1139 = vsel %vm372, %v1125, %v1127
        %v1140 = vsel %vm372, %v1129, %v1131
        %v1141 = vsel %vm372, %v1133, %v1135
        %v1154 = vadd.f32 %v992, %v1136
        %v1155 = vadd.f32 %v993, %v1115
        %v1156 = vadd.f32 %v994, %v1137
        %v1157 = vadd.f32 %v995, %v1119
        %v1158 = vadd.f32 %v996, %v1138
        %v1159 = vadd.f32 %v997, %v1123
        %v1160 = vadd.f32 %v998, %v1139
        %v1161 = vadd.f32 %v999, %v1127
        %v1162 = vadd.f32 %v1000, %v1140
        %v1163 = vadd.f32 %v1001, %v1131
        %v1164 = vadd.f32 %v1002, %v1141
        %v1165 = vadd.f32 %v1003, %v1135
        %1166 = vrot.lane.b32.xlu0 %v1068, 127
        %v1167 = vpop.permute.xlu0 %1166
        %1168 = vrot.lane.b32.xlu0 %v1069, 127
        %v1169 = vpop.permute.xlu0 %1168
        %1170 = vrot.lane.b32.xlu0 %v1070, 127
        %v1171 = vpop.permute.xlu0 %1170
        %1172 = vrot.lane.b32.xlu0 %v1071, 127
        %v1173 = vpop.permute.xlu0 %1172
        %1174 = vrot.lane.b32.xlu0 %v1072, 127
        %v1175 = vpop.permute.xlu0 %1174
        %1176 = vrot.lane.b32.xlu0 %v1073, 127
        %v1177 = vpop.permute.xlu0 %1176
        %1178 = vrot.lane.b32.xlu0 %v1074, 127
        %v1179 = vpop.permute.xlu0 %1178
        %1180 = vrot.lane.b32.xlu0 %v1075, 127
        %v1181 = vpop.permute.xlu0 %1180
        %1182 = vrot.lane.b32.xlu0 %v1076, 127
        %v1183 = vpop.permute.xlu0 %1182
        %1184 = vrot.lane.b32.xlu0 %v1077, 127
        %v1185 = vpop.permute.xlu0 %1184
        %1186 = vrot.lane.b32.xlu0 %v1078, 127
        %v1187 = vpop.permute.xlu0 %1186
        %1188 = vrot.lane.b32.xlu0 %v1079, 127
        %v1189 = vpop.permute.xlu0 %1188
        %v1190 = vsel %vm372, %v1167, %v1169
        %v1191 = vsel %vm372, %v1171, %v1173
        %v1192 = vsel %vm372, %v1175, %v1177
        %v1193 = vsel %vm372, %v1179, %v1181
        %v1194 = vsel %vm372, %v1183, %v1185
        %v1195 = vsel %vm372, %v1187, %v1189
        %v1208 = vadd.f32 %v944, %v1190
        %v1209 = vadd.f32 %v945, %v1169
        %v1210 = vadd.f32 %v549, %v1191
        %v1211 = vadd.f32 %v550, %v1173
        %v1212 = vadd.f32 %v946, %v1192
        %v1213 = vadd.f32 %v947, %v1177
        %v1214 = vadd.f32 %v948, %v1193
        %v1215 = vadd.f32 %v949, %v1181
        %v1216 = vadd.f32 %v555, %v1194
        %v1217 = vadd.f32 %v556, %v1185
        %v1218 = vadd.f32 %v950, %v1195
        %v1219 = vadd.f32 %v951, %v1189
        %v1232 = vadd.f32 %v547, %v1094
        %v1233 = vadd.f32 %v548, %v1097
        %v1234 = vadd.f32 %v549, %v1099
        %v1235 = vadd.f32 %v550, %v1101
        %v1236 = vadd.f32 %v551, %v1098
        %v1237 = vadd.f32 %v552, %v1100
        %v1238 = vadd.f32 %v553, %v1104
        %v1239 = vadd.f32 %v554, %v1107
        %v1240 = vadd.f32 %v555, %v1109
        %v1241 = vadd.f32 %v556, %v1111
        %v1242 = vadd.f32 %v557, %v1108
        %v1243 = vadd.f32 %v558, %v1110
        %v1244 = vadd.f32 %v547, %v1136
        %v1245 = vadd.f32 %v548, %v1115
        %v1246 = vadd.f32 %v549, %v1137
        %v1247 = vadd.f32 %v550, %v1119
        %v1248 = vadd.f32 %v551, %v1138
        %v1249 = vadd.f32 %v552, %v1123
        %v1250 = vadd.f32 %v553, %v1139
        %v1251 = vadd.f32 %v554, %v1127
        %v1252 = vadd.f32 %v555, %v1140
        %v1253 = vadd.f32 %v556, %v1131
        %v1254 = vadd.f32 %v557, %v1141
        %v1255 = vadd.f32 %v558, %v1135
        %v1256 = vrot.slane %v1068, 2
        %v1257 = vrot.slane %v1070, 2
        %v1258 = vsel %vm921, %v1256, %v1257
        %v1259 = vrot.slane %v1069, 2
        %v1260 = vrot.slane %v1071, 2
        %v1261 = vsel %vm921, %v1259, %v1260
        %v1262 = vrot.slane %v1072, 2
        %v1263 = vsel %vm921, %v1257, %v1262
        %v1264 = vrot.slane %v1073, 2
        %v1265 = vsel %vm921, %v1260, %v1264
        %v1266 = vrot.slane %v1074, 2
        %v1267 = vrot.slane %v1076, 2
        %v1268 = vsel %vm921, %v1266, %v1267
        %v1269 = vrot.slane %v1075, 2
        %v1270 = vrot.slane %v1077, 2
        %v1271 = vsel %vm921, %v1269, %v1270
        %v1272 = vrot.slane %v1078, 2
        %v1273 = vsel %vm921, %v1267, %v1272
        %v1274 = vrot.slane %v1079, 2
        %v1275 = vsel %vm921, %v1270, %v1274
        %1276 = vrot.lane.b32.xlu0 %v1258, 126
        %v1277 = vpop.permute.xlu0 %1276
        %1278 = vrot.lane.b32.xlu0 %v1261, 126
        %v1279 = vpop.permute.xlu0 %1278
        %1280 = vrot.lane.b32.xlu0 %v1263, 126
        %v1281 = vpop.permute.xlu0 %1280
        %1282 = vrot.lane.b32.xlu0 %v1265, 126
        %v1283 = vpop.permute.xlu0 %1282
        %1284 = vrot.lane.b32.xlu0 %v1268, 126
        %v1285 = vpop.permute.xlu0 %1284
        %1286 = vrot.lane.b32.xlu0 %v1271, 126
        %v1287 = vpop.permute.xlu0 %1286
        %1288 = vrot.lane.b32.xlu0 %v1273, 126
        %v1289 = vpop.permute.xlu0 %1288
        %1290 = vrot.lane.b32.xlu0 %v1275, 126
        %v1291 = vpop.permute.xlu0 %1290
        %v1292 = vsel %vm417, %v1277, %v1279
        %v1293 = vsel %vm417, %v1281, %v1283
        %v1294 = vsel %vm417, %v1285, %v1287
        %v1295 = vsel %vm417, %v1289, %v1291
        %v1300 = vadd.f32 %v1064, %v1292
        %v1301 = vadd.f32 %v1065, %v1293
        %v1302 = vadd.f32 %v1066, %v1294
        %v1303 = vadd.f32 %v1067, %v1295
        %1304 = vrot.lane.b32.xlu0 %v962, 126
        %v1305 = vpop.permute.xlu0 %1304
        %1306 = vrot.lane.b32.xlu0 %v965, 126
        %v1307 = vpop.permute.xlu0 %1306
        %1308 = vrot.lane.b32.xlu0 %v967, 126
        %v1309 = vpop.permute.xlu0 %1308
        %1310 = vrot.lane.b32.xlu0 %v969, 126
        %v1311 = vpop.permute.xlu0 %1310
        %1312 = vrot.lane.b32.xlu0 %v966, 126
        %v1313 = vpop.permute.xlu0 %1312
        %1314 = vrot.lane.b32.xlu0 %v968, 126
        %v1315 = vpop.permute.xlu0 %1314
        %1316 = vrot.lane.b32.xlu0 %v972, 126
        %v1317 = vpop.permute.xlu0 %1316
        %1318 = vrot.lane.b32.xlu0 %v975, 126
        %v1319 = vpop.permute.xlu0 %1318
        %1320 = vrot.lane.b32.xlu0 %v977, 126
        %v1321 = vpop.permute.xlu0 %1320
        %1322 = vrot.lane.b32.xlu0 %v979, 126
        %v1323 = vpop.permute.xlu0 %1322
        %1324 = vrot.lane.b32.xlu0 %v976, 126
        %v1325 = vpop.permute.xlu0 %1324
        %1326 = vrot.lane.b32.xlu0 %v978, 126
        %v1327 = vpop.permute.xlu0 %1326
        %v1328 = vsel %vm417, %v1305, %v1307
        %v1329 = vsel %vm417, %v1309, %v1311
        %v1330 = vsel %vm417, %v1313, %v1315
        %v1331 = vsel %vm417, %v1317, %v1319
        %v1332 = vsel %vm417, %v1321, %v1323
        %v1333 = vsel %vm417, %v1325, %v1327
        %v1346 = vadd.f32 %v1154, %v1328
        %v1347 = vadd.f32 %v1155, %v1307
        %v1348 = vadd.f32 %v1156, %v1329
        %v1349 = vadd.f32 %v1157, %v1311
        %v1350 = vadd.f32 %v1158, %v1330
        %v1351 = vadd.f32 %v1159, %v1315
        %v1352 = vadd.f32 %v1160, %v1331
        %v1353 = vadd.f32 %v1161, %v1319
        %v1354 = vadd.f32 %v1162, %v1332
        %v1355 = vadd.f32 %v1163, %v1323
        %v1356 = vadd.f32 %v1164, %v1333
        %v1357 = vadd.f32 %v1165, %v1327
        %1358 = vrot.lane.b32.xlu0 %v944, 126
        %v1359 = vpop.permute.xlu0 %1358
        %1360 = vrot.lane.b32.xlu0 %v945, 126
        %v1361 = vpop.permute.xlu0 %1360
        %1362 = vrot.lane.b32.xlu0 %v549, 126
        %v1363 = vpop.permute.xlu0 %1362
        %1364 = vrot.lane.b32.xlu0 %v550, 126
        %v1365 = vpop.permute.xlu0 %1364
        %1366 = vrot.lane.b32.xlu0 %v946, 126
        %v1367 = vpop.permute.xlu0 %1366
        %1368 = vrot.lane.b32.xlu0 %v947, 126
        %v1369 = vpop.permute.xlu0 %1368
        %1370 = vrot.lane.b32.xlu0 %v948, 126
        %v1371 = vpop.permute.xlu0 %1370
        %1372 = vrot.lane.b32.xlu0 %v949, 126
        %v1373 = vpop.permute.xlu0 %1372
        %1374 = vrot.lane.b32.xlu0 %v555, 126
        %v1375 = vpop.permute.xlu0 %1374
        %1376 = vrot.lane.b32.xlu0 %v556, 126
        %v1377 = vpop.permute.xlu0 %1376
        %1378 = vrot.lane.b32.xlu0 %v950, 126
        %v1379 = vpop.permute.xlu0 %1378
        %1380 = vrot.lane.b32.xlu0 %v951, 126
        %v1381 = vpop.permute.xlu0 %1380
        %v1382 = vsel %vm417, %v1359, %v1361
        %v1383 = vsel %vm417, %v1363, %v1365
        %v1384 = vsel %vm417, %v1367, %v1369
        %v1385 = vsel %vm417, %v1371, %v1373
        %v1386 = vsel %vm417, %v1375, %v1377
        %v1387 = vsel %vm417, %v1379, %v1381
        %v1400 = vadd.f32 %v1208, %v1382
        %v1401 = vadd.f32 %v1209, %v1361
        %v1402 = vadd.f32 %v1210, %v1383
        %v1403 = vadd.f32 %v1211, %v1365
        %v1404 = vadd.f32 %v1212, %v1384
        %v1405 = vadd.f32 %v1213, %v1369
        %v1406 = vadd.f32 %v1214, %v1385
        %v1407 = vadd.f32 %v1215, %v1373
        %v1408 = vadd.f32 %v1216, %v1386
        %v1409 = vadd.f32 %v1217, %v1377
        %v1410 = vadd.f32 %v1218, %v1387
        %v1411 = vadd.f32 %v1219, %v1381
        %1412 = vrot.lane.b32.xlu0 %v1022, 125
        %v1413 = vpop.permute.xlu0 %1412
        %1414 = vrot.lane.b32.xlu0 %v1025, 125
        %v1415 = vpop.permute.xlu0 %1414
        %1416 = vrot.lane.b32.xlu0 %v1027, 125
        %v1417 = vpop.permute.xlu0 %1416
        %1418 = vrot.lane.b32.xlu0 %v1029, 125
        %v1419 = vpop.permute.xlu0 %1418
        %1420 = vrot.lane.b32.xlu0 %v1032, 125
        %v1421 = vpop.permute.xlu0 %1420
        %1422 = vrot.lane.b32.xlu0 %v1035, 125
        %v1423 = vpop.permute.xlu0 %1422
        %1424 = vrot.lane.b32.xlu0 %v1037, 125
        %v1425 = vpop.permute.xlu0 %1424
        %1426 = vrot.lane.b32.xlu0 %v1039, 125
        %v1427 = vpop.permute.xlu0 %1426
        %v1428 = vsel %vm446, %v1413, %v1415
        %v1429 = vsel %vm446, %v1417, %v1419
        %v1430 = vsel %vm446, %v1421, %v1423
        %v1431 = vsel %vm446, %v1425, %v1427
        %v1436 = vadd.f32 %v1300, %v1428
        %v1437 = vadd.f32 %v1301, %v1429
        %v1438 = vadd.f32 %v1302, %v1430
        %v1439 = vadd.f32 %v1303, %v1431
        %v1440 = vmul.f32 %v940, -0.16666667
        %v1441 = vmul.f32 %v941, -0.16666667
        %v1442 = vmul.f32 %v942, -0.16666667
        %v1443 = vmul.f32 %v943, -0.16666667
        %v1448 = vrot.slane %v1440, 2
        %v1449 = vrot.slane %v388, 2
        %v1450 = vsel %vm921, %v1448, %v1449
        %v1451 = vrot.slane %v1441, 2
        %v1452 = vsel %vm921, %v1449, %v1451
        %v1453 = vrot.slane %v1442, 2
        %v1454 = vrot.slane %v392, 2
        %v1455 = vsel %vm921, %v1453, %v1454
        %v1456 = vrot.slane %v1443, 2
        %v1457 = vsel %vm921, %v1454, %v1456
        %1458 = vrot.lane.b32.xlu0 %v924, 124
        %v1459 = vpop.permute.xlu0 %1458
        %1460 = vrot.lane.b32.xlu0 %v1450, 124
        %v1461 = vpop.permute.xlu0 %1460
        %1462 = vrot.lane.b32.xlu0 %v926, 124
        %v1463 = vpop.permute.xlu0 %1462
        %1464 = vrot.lane.b32.xlu0 %v1452, 124
        %v1465 = vpop.permute.xlu0 %1464
        %1466 = vrot.lane.b32.xlu0 %v929, 124
        %v1467 = vpop.permute.xlu0 %1466
        %1468 = vrot.lane.b32.xlu0 %v1455, 124
        %v1469 = vpop.permute.xlu0 %1468
        %1470 = vrot.lane.b32.xlu0 %v931, 124
        %v1471 = vpop.permute.xlu0 %1470
        %1472 = vrot.lane.b32.xlu0 %v1457, 124
        %v1473 = vpop.permute.xlu0 %1472
        %v1474 = vsel %vm487, %v1459, %v1461
        %v1475 = vsel %vm487, %v1463, %v1465
        %v1476 = vsel %vm487, %v1467, %v1469
        %v1477 = vsel %vm487, %v1471, %v1473
        %v1482 = vadd.f32 %v1436, %v1474
        %v1483 = vadd.f32 %v1437, %v1475
        %v1484 = vadd.f32 %v1438, %v1476
        %v1485 = vadd.f32 %v1439, %v1477
        %v1486 = vld [vmem:[#allocation2] sm:$0xf8]
        %v1487 = vld [vmem:[#allocation2 + $0x20] sm:$0x7]
        %v1488 = vld [vmem:[#allocation2 + $0x30] sm:$0xf8]
        %v1489 = vld [vmem:[#allocation2 + $0x50] sm:$0x7]
        %v1490 = vmul.f32 %v1486, 0.16666667
        %v1491 = vmul.f32 %v1487, 0.16666667
        %v1492 = vmul.f32 %v1488, 0.16666667
        %v1493 = vmul.f32 %v1489, 0.16666667
        %vm1498 = vcmask 1044480
        %v1499 = vrot.slane %v1490, 3
        %v1500 = vrot.slane %v342, 3
        %v1501 = vsel %vm1498, %v1499, %v1500
        %v1502 = vrot.slane %v1491, 3
        %v1503 = vsel %vm1498, %v1500, %v1502
        %v1504 = vrot.slane %v1492, 3
        %v1505 = vrot.slane %v346, 3
        %v1506 = vsel %vm1498, %v1504, %v1505
        %v1507 = vrot.slane %v1493, 3
        %v1508 = vsel %vm1498, %v1505, %v1507
        %v1513 = vadd.f32 %v1482, %v1501
        %v1514 = vadd.f32 %v1483, %v1503
        %v1515 = vadd.f32 %v1484, %v1506
        %v1516 = vadd.f32 %v1485, %v1508
        %v1517 = vld [vmem:[#allocation2 + $0x8] sm:$0xf8]
        %v1518 = vld [vmem:[#allocation2 + $0x28] sm:$0x7]
        %v1519 = vld [vmem:[#allocation2 + $0x38] sm:$0xf8]
        %v1520 = vld [vmem:[#allocation2 + $0x58] sm:$0x7]
        %v1521 = vmul.f32 %v1486, -0.25
        %v1522 = vmul.f32 %v1517, -0.25
        %v1523 = vmul.f32 %v1487, -0.25
        %v1524 = vmul.f32 %v1518, -0.25
        %v1525 = vmul.f32 %v1488, -0.25
        %v1526 = vmul.f32 %v1519, -0.25
        %v1527 = vmul.f32 %v1489, -0.25
        %v1528 = vmul.f32 %v1520, -0.25
        %v1537 = vrot.slane %v1521, 2
        %v1538 = vrot.slane %v537, 2
        %v1539 = vsel %vm921, %v1537, %v1538
        %v1540 = vrot.slane %v1522, 2
        %v1541 = vrot.slane %v538, 2
        %v1542 = vsel %vm921, %v1540, %v1541
        %v1543 = vrot.slane %v1523, 2
        %v1544 = vsel %vm921, %v1538, %v1543
        %v1545 = vrot.slane %v1524, 2
        %v1546 = vsel %vm921, %v1541, %v1545
        %v1547 = vrot.slane %v1525, 2
        %v1548 = vrot.slane %v543, 2
        %v1549 = vsel %vm921, %v1547, %v1548
        %v1550 = vrot.slane %v1526, 2
        %v1551 = vrot.slane %v544, 2
        %v1552 = vsel %vm921, %v1550, %v1551
        %v1553 = vrot.slane %v1527, 2
        %v1554 = vsel %vm921, %v1548, %v1553
        %v1555 = vrot.slane %v1528, 2
        %v1556 = vsel %vm921, %v1551, %v1555
        %v1569 = vadd.f32 %v1346, %v1539
        %v1570 = vadd.f32 %v1347, %v1542
        %v1571 = vadd.f32 %v1348, %v1544
        %v1572 = vadd.f32 %v1349, %v1546
        %v1573 = vadd.f32 %v1350, %v1543
        %v1574 = vadd.f32 %v1351, %v1545
        %v1575 = vadd.f32 %v1352, %v1549
        %v1576 = vadd.f32 %v1353, %v1552
        %v1577 = vadd.f32 %v1354, %v1554
        %v1578 = vadd.f32 %v1355, %v1556
        %v1579 = vadd.f32 %v1356, %v1553
        %v1580 = vadd.f32 %v1357, %v1555
        %v1581 = vmul.f32 %v1486, -0.5
        %v1582 = vmul.f32 %v1517, -0.5
        %v1583 = vmul.f32 %v1487, -0.5
        %v1584 = vmul.f32 %v1518, -0.5
        %v1585 = vmul.f32 %v1488, -0.5
        %v1586 = vmul.f32 %v1519, -0.5
        %v1587 = vmul.f32 %v1489, -0.5
        %v1588 = vmul.f32 %v1520, -0.5
        %v1597 = vrot.slane %v1581, 3
        %v1598 = vrot.slane %v561, 3
        %v1599 = vsel %vm1498, %v1597, %v1598
        %v1600 = vrot.slane %v1582, 3
        %v1601 = vrot.slane %v562, 3
        %v1602 = vsel %vm1498, %v1600, %v1601
        %v1603 = vrot.slane %v1583, 3
        %v1604 = vsel %vm1498, %v1598, %v1603
        %v1605 = vrot.slane %v1584, 3
        %v1606 = vsel %vm1498, %v1601, %v1605
        %v1607 = vrot.slane %v1585, 3
        %v1608 = vrot.slane %v567, 3
        %v1609 = vsel %vm1498, %v1607, %v1608
        %v1610 = vrot.slane %v1586, 3
        %v1611 = vrot.slane %v568, 3
        %v1612 = vsel %vm1498, %v1610, %v1611
        %v1613 = vrot.slane %v1587, 3
        %v1614 = vsel %vm1498, %v1608, %v1613
        %v1615 = vrot.slane %v1588, 3
        %v1616 = vsel %vm1498, %v1611, %v1615
        %1617 = vrot.lane.b32.xlu0 %v1599, 127
        %v1618 = vpop.permute.xlu0 %1617
        %1619 = vrot.lane.b32.xlu0 %v1602, 127
        %v1620 = vpop.permute.xlu0 %1619
        %1621 = vrot.lane.b32.xlu0 %v1604, 127
        %v1622 = vpop.permute.xlu0 %1621
        %1623 = vrot.lane.b32.xlu0 %v1606, 127
        %v1624 = vpop.permute.xlu0 %1623
        %1625 = vrot.lane.b32.xlu0 %v1609, 127
        %v1626 = vpop.permute.xlu0 %1625
        %1627 = vrot.lane.b32.xlu0 %v1612, 127
        %v1628 = vpop.permute.xlu0 %1627
        %1629 = vrot.lane.b32.xlu0 %v1614, 127
        %v1630 = vpop.permute.xlu0 %1629
        %1631 = vrot.lane.b32.xlu0 %v1616, 127
        %v1632 = vpop.permute.xlu0 %1631
        %v1633 = vsel %vm372, %v1618, %v1620
        %v1634 = vsel %vm372, %v1622, %v1624
        %v1635 = vsel %vm372, %v1626, %v1628
        %v1636 = vsel %vm372, %v1630, %v1632
        %v1641 = vadd.f32 %v1513, %v1633
        %v1642 = vadd.f32 %v1514, %v1634
        %v1643 = vadd.f32 %v1515, %v1635
        %v1644 = vadd.f32 %v1516, %v1636
        %v1645 = vmul.f32 %v1486, 0.5
        %v1646 = vmul.f32 %v1517, 0.5
        %v1647 = vmul.f32 %v1487, 0.5
        %v1648 = vmul.f32 %v1518, 0.5
        %v1649 = vmul.f32 %v1488, 0.5
        %v1650 = vmul.f32 %v1519, 0.5
        %v1651 = vmul.f32 %v1489, 0.5
        %v1652 = vmul.f32 %v1520, 0.5
        %v1661 = vrot.slane %v1645, 2
        %v1662 = vrot.slane %v549, 2
        %v1663 = vsel %vm921, %v1661, %v1662
        %v1664 = vrot.slane %v1646, 2
        %v1665 = vrot.slane %v550, 2
        %v1666 = vsel %vm921, %v1664, %v1665
        %v1667 = vrot.slane %v1647, 2
        %v1668 = vsel %vm921, %v1662, %v1667
        %v1669 = vrot.slane %v1648, 2
        %v1670 = vsel %vm921, %v1665, %v1669
        %v1671 = vrot.slane %v1649, 2
        %v1672 = vrot.slane %v555, 2
        %v1673 = vsel %vm921, %v1671, %v1672
        %v1674 = vrot.slane %v1650, 2
        %v1675 = vrot.slane %v556, 2
        %v1676 = vsel %vm921, %v1674, %v1675
        %v1677 = vrot.slane %v1651, 2
        %v1678 = vsel %vm921, %v1672, %v1677
        %v1679 = vrot.slane %v1652, 2
        %v1680 = vsel %vm921, %v1675, %v1679
        %1681 = vrot.lane.b32.xlu0 %v1663, 127
        %v1682 = vpop.permute.xlu0 %1681
        %1683 = vrot.lane.b32.xlu0 %v1666, 127
        %v1684 = vpop.permute.xlu0 %1683
        %1685 = vrot.lane.b32.xlu0 %v1668, 127
        %v1686 = vpop.permute.xlu0 %1685
        %1687 = vrot.lane.b32.xlu0 %v1670, 127
        %v1688 = vpop.permute.xlu0 %1687
        %1689 = vrot.lane.b32.xlu0 %v1667, 127
        %v1690 = vpop.permute.xlu0 %1689
        %1691 = vrot.lane.b32.xlu0 %v1669, 127
        %v1692 = vpop.permute.xlu0 %1691
        %1693 = vrot.lane.b32.xlu0 %v1673, 127
        %v1694 = vpop.permute.xlu0 %1693
        %1695 = vrot.lane.b32.xlu0 %v1676, 127
        %v1696 = vpop.permute.xlu0 %1695
        %1697 = vrot.lane.b32.xlu0 %v1678, 127
        %v1698 = vpop.permute.xlu0 %1697
        %1699 = vrot.lane.b32.xlu0 %v1680, 127
        %v1700 = vpop.permute.xlu0 %1699
        %1701 = vrot.lane.b32.xlu0 %v1677, 127
        %v1702 = vpop.permute.xlu0 %1701
        %1703 = vrot.lane.b32.xlu0 %v1679, 127
        %v1704 = vpop.permute.xlu0 %1703
        %v1705 = vsel %vm372, %v1682, %v1684
        %v1706 = vsel %vm372, %v1686, %v1688
        %v1707 = vsel %vm372, %v1690, %v1692
        %v1708 = vsel %vm372, %v1694, %v1696
        %v1709 = vsel %vm372, %v1698, %v1700
        %v1710 = vsel %vm372, %v1702, %v1704
        %v1723 = vadd.f32 %v1569, %v1705
        %v1724 = vadd.f32 %v1570, %v1684
        %v1725 = vadd.f32 %v1571, %v1706
        %v1726 = vadd.f32 %v1572, %v1688
        %v1727 = vadd.f32 %v1573, %v1707
        %v1728 = vadd.f32 %v1574, %v1692
        %v1729 = vadd.f32 %v1575, %v1708
        %v1730 = vadd.f32 %v1576, %v1696
        %v1731 = vadd.f32 %v1577, %v1709
        %v1732 = vadd.f32 %v1578, %v1700
        %v1733 = vadd.f32 %v1579, %v1710
        %v1734 = vadd.f32 %v1580, %v1704
        %v1747 = vadd.f32 %v1232, %v1663
        %v1748 = vadd.f32 %v1233, %v1666
        %v1749 = vadd.f32 %v1234, %v1668
        %v1750 = vadd.f32 %v1235, %v1670
        %v1751 = vadd.f32 %v1236, %v1667
        %v1752 = vadd.f32 %v1237, %v1669
        %v1753 = vadd.f32 %v1238, %v1673
        %v1754 = vadd.f32 %v1239, %v1676
        %v1755 = vadd.f32 %v1240, %v1678
        %v1756 = vadd.f32 %v1241, %v1680
        %v1757 = vadd.f32 %v1242, %v1677
        %v1758 = vadd.f32 %v1243, %v1679
        %v1759 = vmul.f32 %v1486, 0.6666667
        %v1760 = vmul.f32 %v1517, 0.6666667
        %v1761 = vmul.f32 %v1487, 0.6666667
        %v1762 = vmul.f32 %v1518, 0.6666667
        %v1763 = vmul.f32 %v1488, 0.6666667
        %v1764 = vmul.f32 %v1519, 0.6666667
        %v1765 = vmul.f32 %v1489, 0.6666667
        %v1766 = vmul.f32 %v1520, 0.6666667
        %v1775 = vrot.slane %v1759, 3
        %v1776 = vrot.slane %v699, 3
        %v1777 = vsel %vm1498, %v1775, %v1776
        %v1778 = vrot.slane %v1760, 3
        %v1779 = vrot.slane %v700, 3
        %v1780 = vsel %vm1498, %v1778, %v1779
        %v1781 = vrot.slane %v1761, 3
        %v1782 = vsel %vm1498, %v1776, %v1781
        %v1783 = vrot.slane %v1762, 3
        %v1784 = vsel %vm1498, %v1779, %v1783
        %v1785 = vrot.slane %v1763, 3
        %v1786 = vrot.slane %v705, 3
        %v1787 = vsel %vm1498, %v1785, %v1786
        %v1788 = vrot.slane %v1764, 3
        %v1789 = vrot.slane %v706, 3
        %v1790 = vsel %vm1498, %v1788, %v1789
        %v1791 = vrot.slane %v1765, 3
        %v1792 = vsel %vm1498, %v1786, %v1791
        %v1793 = vrot.slane %v1766, 3
        %v1794 = vsel %vm1498, %v1789, %v1793
        %1795 = vrot.lane.b32.xlu0 %v1777, 126
        %v1796 = vpop.permute.xlu0 %1795
        %1797 = vrot.lane.b32.xlu0 %v1780, 126
        %v1798 = vpop.permute.xlu0 %1797
        %1799 = vrot.lane.b32.xlu0 %v1782, 126
        %v1800 = vpop.permute.xlu0 %1799
        %1801 = vrot.lane.b32.xlu0 %v1784, 126
        %v1802 = vpop.permute.xlu0 %1801
        %1803 = vrot.lane.b32.xlu0 %v1787, 126
        %v1804 = vpop.permute.xlu0 %1803
        %1805 = vrot.lane.b32.xlu0 %v1790, 126
        %v1806 = vpop.permute.xlu0 %1805
        %1807 = vrot.lane.b32.xlu0 %v1792, 126
        %v1808 = vpop.permute.xlu0 %1807
        %1809 = vrot.lane.b32.xlu0 %v1794, 126
        %v1810 = vpop.permute.xlu0 %1809
        %v1811 = vsel %vm417, %v1796, %v1798
        %v1812 = vsel %vm417, %v1800, %v1802
        %v1813 = vsel %vm417, %v1804, %v1806
        %v1814 = vsel %vm417, %v1808, %v1810
        %v1819 = vadd.f32 %v1641, %v1811
        %v1820 = vadd.f32 %v1642, %v1812
        %v1821 = vadd.f32 %v1643, %v1813
        %v1822 = vadd.f32 %v1644, %v1814
        %1823 = vrot.lane.b32.xlu0 %v1539, 126
        %v1824 = vpop.permute.xlu0 %1823
        %1825 = vrot.lane.b32.xlu0 %v1542, 126
        %v1826 = vpop.permute.xlu0 %1825
        %1827 = vrot.lane.b32.xlu0 %v1544, 126
        %v1828 = vpop.permute.xlu0 %1827
        %1829 = vrot.lane.b32.xlu0 %v1546, 126
        %v1830 = vpop.permute.xlu0 %1829
        %1831 = vrot.lane.b32.xlu0 %v1543, 126
        %v1832 = vpop.permute.xlu0 %1831
        %1833 = vrot.lane.b32.xlu0 %v1545, 126
        %v1834 = vpop.permute.xlu0 %1833
        %1835 = vrot.lane.b32.xlu0 %v1549, 126
        %v1836 = vpop.permute.xlu0 %1835
        %1837 = vrot.lane.b32.xlu0 %v1552, 126
        %v1838 = vpop.permute.xlu0 %1837
        %1839 = vrot.lane.b32.xlu0 %v1554, 126
        %v1840 = vpop.permute.xlu0 %1839
        %1841 = vrot.lane.b32.xlu0 %v1556, 126
        %v1842 = vpop.permute.xlu0 %1841
        %1843 = vrot.lane.b32.xlu0 %v1553, 126
        %v1844 = vpop.permute.xlu0 %1843
        %1845 = vrot.lane.b32.xlu0 %v1555, 126
        %v1846 = vpop.permute.xlu0 %1845
        %v1847 = vsel %vm417, %v1824, %v1826
        %v1848 = vsel %vm417, %v1828, %v1830
        %v1849 = vsel %vm417, %v1832, %v1834
        %v1850 = vsel %vm417, %v1836, %v1838
        %v1851 = vsel %vm417, %v1840, %v1842
        %v1852 = vsel %vm417, %v1844, %v1846
        %v1865 = vadd.f32 %v1723, %v1847
        %v1866 = vadd.f32 %v1724, %v1826
        %v1867 = vadd.f32 %v1725, %v1848
        %v1868 = vadd.f32 %v1726, %v1830
        %v1869 = vadd.f32 %v1727, %v1849
        %v1870 = vadd.f32 %v1728, %v1834
        %v1871 = vadd.f32 %v1729, %v1850
        %v1872 = vadd.f32 %v1730, %v1838
        %v1873 = vadd.f32 %v1731, %v1851
        %v1874 = vadd.f32 %v1732, %v1842
        %v1875 = vadd.f32 %v1733, %v1852
        %v1876 = vadd.f32 %v1734, %v1846
        %1877 = vrot.lane.b32.xlu0 %v1663, 126
        %v1878 = vpop.permute.xlu0 %1877
        %1879 = vrot.lane.b32.xlu0 %v1666, 126
        %v1880 = vpop.permute.xlu0 %1879
        %1881 = vrot.lane.b32.xlu0 %v1668, 126
        %v1882 = vpop.permute.xlu0 %1881
        %1883 = vrot.lane.b32.xlu0 %v1670, 126
        %v1884 = vpop.permute.xlu0 %1883
        %1885 = vrot.lane.b32.xlu0 %v1667, 126
        %v1886 = vpop.permute.xlu0 %1885
        %1887 = vrot.lane.b32.xlu0 %v1669, 126
        %v1888 = vpop.permute.xlu0 %1887
        %1889 = vrot.lane.b32.xlu0 %v1673, 126
        %v1890 = vpop.permute.xlu0 %1889
        %1891 = vrot.lane.b32.xlu0 %v1676, 126
        %v1892 = vpop.permute.xlu0 %1891
        %1893 = vrot.lane.b32.xlu0 %v1678, 126
        %v1894 = vpop.permute.xlu0 %1893
        %1895 = vrot.lane.b32.xlu0 %v1680, 126
        %v1896 = vpop.permute.xlu0 %1895
        %1897 = vrot.lane.b32.xlu0 %v1677, 126
        %v1898 = vpop.permute.xlu0 %1897
        %1899 = vrot.lane.b32.xlu0 %v1679, 126
        %v1900 = vpop.permute.xlu0 %1899
        %v1901 = vsel %vm417, %v1878, %v1880
        %v1902 = vsel %vm417, %v1882, %v1884
        %v1903 = vsel %vm417, %v1886, %v1888
        %v1904 = vsel %vm417, %v1890, %v1892
        %v1905 = vsel %vm417, %v1894, %v1896
        %v1906 = vsel %vm417, %v1898, %v1900
        %v1919 = vadd.f32 %v1244, %v1901
        %v1920 = vadd.f32 %v1245, %v1880
        %v1921 = vadd.f32 %v1246, %v1902
        %v1922 = vadd.f32 %v1247, %v1884
        %v1923 = vadd.f32 %v1248, %v1903
        %v1924 = vadd.f32 %v1249, %v1888
        %v1925 = vadd.f32 %v1250, %v1904
        %v1926 = vadd.f32 %v1251, %v1892
        %v1927 = vadd.f32 %v1252, %v1905
        %v1928 = vadd.f32 %v1253, %v1896
        %v1929 = vadd.f32 %v1254, %v1906
        %v1930 = vadd.f32 %v1255, %v1900
        %1931 = vrot.lane.b32.xlu0 %v1599, 125
        %v1932 = vpop.permute.xlu0 %1931
        %1933 = vrot.lane.b32.xlu0 %v1602, 125
        %v1934 = vpop.permute.xlu0 %1933
        %1935 = vrot.lane.b32.xlu0 %v1604, 125
        %v1936 = vpop.permute.xlu0 %1935
        %1937 = vrot.lane.b32.xlu0 %v1606, 125
        %v1938 = vpop.permute.xlu0 %1937
        %1939 = vrot.lane.b32.xlu0 %v1609, 125
        %v1940 = vpop.permute.xlu0 %1939
        %1941 = vrot.lane.b32.xlu0 %v1612, 125
        %v1942 = vpop.permute.xlu0 %1941
        %1943 = vrot.lane.b32.xlu0 %v1614, 125
        %v1944 = vpop.permute.xlu0 %1943
        %1945 = vrot.lane.b32.xlu0 %v1616, 125
        %v1946 = vpop.permute.xlu0 %1945
        %v1947 = vsel %vm446, %v1932, %v1934
        %v1948 = vsel %vm446, %v1936, %v1938
        %v1949 = vsel %vm446, %v1940, %v1942
        %v1950 = vsel %vm446, %v1944, %v1946
        %v1955 = vadd.f32 %v1819, %v1947
        %v1956 = vadd.f32 %v1820, %v1948
        %v1957 = vadd.f32 %v1821, %v1949
        %v1958 = vadd.f32 %v1822, %v1950
        %v1959 = vmul.f32 %v1517, 0.16666667
        %v1960 = vmul.f32 %v1518, 0.16666667
        %v1961 = vmul.f32 %v1519, 0.16666667
        %v1962 = vmul.f32 %v1520, 0.16666667
        %v1967 = vrot.slane %v1959, 3
        %v1968 = vrot.slane %v343, 3
        %v1969 = vsel %vm1498, %v1967, %v1968
        %v1970 = vrot.slane %v1960, 3
        %v1971 = vsel %vm1498, %v1968, %v1970
        %v1972 = vrot.slane %v1961, 3
        %v1973 = vrot.slane %v347, 3
        %v1974 = vsel %vm1498, %v1972, %v1973
        %v1975 = vrot.slane %v1962, 3
        %v1976 = vsel %vm1498, %v1973, %v1975
        %1977 = vrot.lane.b32.xlu0 %v1501, 124
        %v1978 = vpop.permute.xlu0 %1977
        %1979 = vrot.lane.b32.xlu0 %v1969, 124
        %v1980 = vpop.permute.xlu0 %1979
        %1981 = vrot.lane.b32.xlu0 %v1503, 124
        %v1982 = vpop.permute.xlu0 %1981
        %1983 = vrot.lane.b32.xlu0 %v1971, 124
        %v1984 = vpop.permute.xlu0 %1983
        %1985 = vrot.lane.b32.xlu0 %v1506, 124
        %v1986 = vpop.permute.xlu0 %1985
        %1987 = vrot.lane.b32.xlu0 %v1974, 124
        %v1988 = vpop.permute.xlu0 %1987
        %1989 = vrot.lane.b32.xlu0 %v1508, 124
        %v1990 = vpop.permute.xlu0 %1989
        %1991 = vrot.lane.b32.xlu0 %v1976, 124
        %v1992 = vpop.permute.xlu0 %1991
        %v1993 = vsel %vm487, %v1978, %v1980
        %v1994 = vsel %vm487, %v1982, %v1984
        %v1995 = vsel %vm487, %v1986, %v1988
        %v1996 = vsel %vm487, %v1990, %v1992
        %v2001 = vadd.f32 %v1955, %v1993
        %v2002 = vadd.f32 %v1956, %v1994
        %v2003 = vadd.f32 %v1957, %v1995
        %v2004 = vadd.f32 %v1958, %v1996
        %v2005 = vld [vmem:[#allocation2] sm:$0xf0]
        %v2006 = vld [vmem:[#allocation2 + $0x20] sm:$0xf]
        %v2007 = vld [vmem:[#allocation2 + $0x30] sm:$0xf0]
        %v2008 = vld [vmem:[#allocation2 + $0x50] sm:$0xf]
        %v2009 = vmul.f32 %v2005, -0.083333336
        %v2010 = vmul.f32 %v2006, -0.083333336
        %v2011 = vmul.f32 %v2007, -0.083333336
        %v2012 = vmul.f32 %v2008, -0.083333336
        %vm2017 = vcmask 1043456
        %v2018 = vrot.slane %v2009, 4
        %v2019 = vrot.slane %v333, 4
        %v2020 = vsel %vm2017, %v2018, %v2019
        %v2021 = vrot.slane %v2010, 4
        %v2022 = vsel %vm2017, %v2019, %v2021
        %v2023 = vrot.slane %v2011, 4
        %v2024 = vrot.slane %v335, 4
        %v2025 = vsel %vm2017, %v2023, %v2024
        %v2026 = vrot.slane %v2012, 4
        %v2027 = vsel %vm2017, %v2024, %v2026
        %v2032 = vadd.f32 %v2001, %v2020
        %v2033 = vadd.f32 %v2002, %v2022
        %v2034 = vadd.f32 %v2003, %v2025
        %v2035 = vadd.f32 %v2004, %v2027
        %v2036 = vld [vmem:[#allocation2 + $0x8] sm:$0xf0]
        %v2037 = vld [vmem:[#allocation2 + $0x28] sm:$0xf]
        %v2038 = vld [vmem:[#allocation2 + $0x38] sm:$0xf0]
        %v2039 = vld [vmem:[#allocation2 + $0x58] sm:$0xf]
        %v2040 = vmul.f32 %v2005, 0.16666667
        %v2041 = vmul.f32 %v2036, 0.16666667
        %v2042 = vmul.f32 %v2006, 0.16666667
        %v2043 = vmul.f32 %v2037, 0.16666667
        %v2044 = vmul.f32 %v2007, 0.16666667
        %v2045 = vmul.f32 %v2038, 0.16666667
        %v2046 = vmul.f32 %v2008, 0.16666667
        %v2047 = vmul.f32 %v2039, 0.16666667
        %v2056 = vrot.slane %v2040, 4
        %v2057 = vrot.slane %v342, 4
        %v2058 = vsel %vm2017, %v2056, %v2057
        %v2059 = vrot.slane %v2041, 4
        %v2060 = vrot.slane %v343, 4
        %v2061 = vsel %vm2017, %v2059, %v2060
        %v2062 = vrot.slane %v2042, 4
        %v2063 = vsel %vm2017, %v2057, %v2062
        %v2064 = vrot.slane %v2043, 4
        %v2065 = vsel %vm2017, %v2060, %v2064
        %v2066 = vrot.slane %v2044, 4
        %v2067 = vrot.slane %v346, 4
        %v2068 = vsel %vm2017, %v2066, %v2067
        %v2069 = vrot.slane %v2045, 4
        %v2070 = vrot.slane %v347, 4
        %v2071 = vsel %vm2017, %v2069, %v2070
        %v2072 = vrot.slane %v2046, 4
        %v2073 = vsel %vm2017, %v2067, %v2072
        %v2074 = vrot.slane %v2047, 4
        %v2075 = vsel %vm2017, %v2070, %v2074
        %2076 = vrot.lane.b32.xlu0 %v2058, 127
        %v2077 = vpop.permute.xlu0 %2076
        %2078 = vrot.lane.b32.xlu0 %v2061, 127
        %v2079 = vpop.permute.xlu0 %2078
        %2080 = vrot.lane.b32.xlu0 %v2063, 127
        %v2081 = vpop.permute.xlu0 %2080
        %2082 = vrot.lane.b32.xlu0 %v2065, 127
        %v2083 = vpop.permute.xlu0 %2082
        %2084 = vrot.lane.b32.xlu0 %v2068, 127
        %v2085 = vpop.permute.xlu0 %2084
        %2086 = vrot.lane.b32.xlu0 %v2071, 127
        %v2087 = vpop.permute.xlu0 %2086
        %2088 = vrot.lane.b32.xlu0 %v2073, 127
        %v2089 = vpop.permute.xlu0 %2088
        %2090 = vrot.lane.b32.xlu0 %v2075, 127
        %v2091 = vpop.permute.xlu0 %2090
        %v2092 = vsel %vm372, %v2077, %v2079
        %v2093 = vsel %vm372, %v2081, %v2083
        %v2094 = vsel %vm372, %v2085, %v2087
        %v2095 = vsel %vm372, %v2089, %v2091
        %v2100 = vadd.f32 %v2032, %v2092
        %v2101 = vadd.f32 %v2033, %v2093
        %v2102 = vadd.f32 %v2034, %v2094
        %v2103 = vadd.f32 %v2035, %v2095
        %v2104 = vmul.f32 %v2005, -0.16666667
        %v2105 = vmul.f32 %v2036, -0.16666667
        %v2106 = vmul.f32 %v2006, -0.16666667
        %v2107 = vmul.f32 %v2037, -0.16666667
        %v2108 = vmul.f32 %v2007, -0.16666667
        %v2109 = vmul.f32 %v2038, -0.16666667
        %v2110 = vmul.f32 %v2008, -0.16666667
        %v2111 = vmul.f32 %v2039, -0.16666667
        %v2120 = vrot.slane %v2104, 4
        %v2121 = vrot.slane %v387, 4
        %v2122 = vsel %vm2017, %v2120, %v2121
        %v2123 = vrot.slane %v2105, 4
        %v2124 = vrot.slane %v388, 4
        %v2125 = vsel %vm2017, %v2123, %v2124
        %v2126 = vrot.slane %v2106, 4
        %v2127 = vsel %vm2017, %v2121, %v2126
        %v2128 = vrot.slane %v2107, 4
        %v2129 = vsel %vm2017, %v2124, %v2128
        %v2130 = vrot.slane %v2108, 4
        %v2131 = vrot.slane %v391, 4
        %v2132 = vsel %vm2017, %v2130, %v2131
        %v2133 = vrot.slane %v2109, 4
        %v2134 = vrot.slane %v392, 4
        %v2135 = vsel %vm2017, %v2133, %v2134
        %v2136 = vrot.slane %v2110, 4
        %v2137 = vsel %vm2017, %v2131, %v2136
        %v2138 = vrot.slane %v2111, 4
        %v2139 = vsel %vm2017, %v2134, %v2138
        %2140 = vrot.lane.b32.xlu0 %v2122, 126
        %v2141 = vpop.permute.xlu0 %2140
        %2142 = vrot.lane.b32.xlu0 %v2125, 126
        %v2143 = vpop.permute.xlu0 %2142
        %2144 = vrot.lane.b32.xlu0 %v2127, 126
        %v2145 = vpop.permute.xlu0 %2144
        %2146 = vrot.lane.b32.xlu0 %v2129, 126
        %v2147 = vpop.permute.xlu0 %2146
        %2148 = vrot.lane.b32.xlu0 %v2132, 126
        %v2149 = vpop.permute.xlu0 %2148
        %2150 = vrot.lane.b32.xlu0 %v2135, 126
        %v2151 = vpop.permute.xlu0 %2150
        %2152 = vrot.lane.b32.xlu0 %v2137, 126
        %v2153 = vpop.permute.xlu0 %2152
        %2154 = vrot.lane.b32.xlu0 %v2139, 126
        %v2155 = vpop.permute.xlu0 %2154
        %v2156 = vsel %vm417, %v2141, %v2143
        %v2157 = vsel %vm417, %v2145, %v2147
        %v2158 = vsel %vm417, %v2149, %v2151
        %v2159 = vsel %vm417, %v2153, %v2155
        %v2164 = vadd.f32 %v2100, %v2156
        %v2165 = vadd.f32 %v2101, %v2157
        %v2166 = vadd.f32 %v2102, %v2158
        %v2167 = vadd.f32 %v2103, %v2159
        %2168 = vrot.lane.b32.xlu0 %v2058, 125
        %v2169 = vpop.permute.xlu0 %2168
        %2170 = vrot.lane.b32.xlu0 %v2061, 125
        %v2171 = vpop.permute.xlu0 %2170
        %2172 = vrot.lane.b32.xlu0 %v2063, 125
        %v2173 = vpop.permute.xlu0 %2172
        %2174 = vrot.lane.b32.xlu0 %v2065, 125
        %v2175 = vpop.permute.xlu0 %2174
        %2176 = vrot.lane.b32.xlu0 %v2068, 125
        %v2177 = vpop.permute.xlu0 %2176
        %2178 = vrot.lane.b32.xlu0 %v2071, 125
        %v2179 = vpop.permute.xlu0 %2178
        %2180 = vrot.lane.b32.xlu0 %v2073, 125
        %v2181 = vpop.permute.xlu0 %2180
        %2182 = vrot.lane.b32.xlu0 %v2075, 125
        %v2183 = vpop.permute.xlu0 %2182
        %v2184 = vsel %vm446, %v2169, %v2171
        %v2185 = vsel %vm446, %v2173, %v2175
        %v2186 = vsel %vm446, %v2177, %v2179
        %v2187 = vsel %vm446, %v2181, %v2183
        %v2192 = vadd.f32 %v2164, %v2184
        %v2193 = vadd.f32 %v2165, %v2185
        %v2194 = vadd.f32 %v2166, %v2186
        %v2195 = vadd.f32 %v2167, %v2187
        %v2196 = vmul.f32 %v2036, -0.083333336
        %v2197 = vmul.f32 %v2037, -0.083333336
        %v2198 = vmul.f32 %v2038, -0.083333336
        %v2199 = vmul.f32 %v2039, -0.083333336
        %v2204 = vrot.slane %v2196, 4
        %v2205 = vrot.slane %v460, 4
        %v2206 = vsel %vm2017, %v2204, %v2205
        %v2207 = vrot.slane %v2197, 4
        %v2208 = vsel %vm2017, %v2205, %v2207
        %v2209 = vrot.slane %v2198, 4
        %v2210 = vrot.slane %v462, 4
        %v2211 = vsel %vm2017, %v2209, %v2210
        %v2212 = vrot.slane %v2199, 4
        %v2213 = vsel %vm2017, %v2210, %v2212
        %2214 = vrot.lane.b32.xlu0 %v2020, 124
        %v2215 = vpop.permute.xlu0 %2214
        %2216 = vrot.lane.b32.xlu0 %v2206, 124
        %v2217 = vpop.permute.xlu0 %2216
        %2218 = vrot.lane.b32.xlu0 %v2022, 124
        %v2219 = vpop.permute.xlu0 %2218
        %2220 = vrot.lane.b32.xlu0 %v2208, 124
        %v2221 = vpop.permute.xlu0 %2220
        %2222 = vrot.lane.b32.xlu0 %v2025, 124
        %v2223 = vpop.permute.xlu0 %2222
        %2224 = vrot.lane.b32.xlu0 %v2211, 124
        %v2225 = vpop.permute.xlu0 %2224
        %2226 = vrot.lane.b32.xlu0 %v2027, 124
        %v2227 = vpop.permute.xlu0 %2226
        %2228 = vrot.lane.b32.xlu0 %v2213, 124
        %v2229 = vpop.permute.xlu0 %2228
        %v2230 = vsel %vm487, %v2215, %v2217
        %v2231 = vsel %vm487, %v2219, %v2221
        %v2232 = vsel %vm487, %v2223, %v2225
        %v2233 = vsel %vm487, %v2227, %v2229
        %v2238 = vadd.f32 %v2192, %v2230
        %v2239 = vadd.f32 %v2193, %v2231
        %v2240 = vadd.f32 %v2194, %v2232
        %v2241 = vadd.f32 %v2195, %v2233
        %s2242 = sld [smem:[#allocation3]]
        %s2243 = sld [smem:[#allocation8]]
        %v2244 = vstv %s2243
        %v2245 = vmul.f32 %v1865, %v2244
        %v2246 = vmul.f32 %v1866, %v2244
        %v2247 = vmul.f32 %v1867, %v2244
        %v2248 = vmul.f32 %v1868, %v2244
        %v2249 = vmul.f32 %v1869, %v2244
        %v2250 = vmul.f32 %v1870, %v2244
        %v2251 = vmul.f32 %v1871, %v2244
        %v2252 = vmul.f32 %v1872, %v2244
        %v2253 = vmul.f32 %v1873, %v2244
        %v2254 = vmul.f32 %v1874, %v2244
        %v2255 = vmul.f32 %v1875, %v2244
        %v2256 = vmul.f32 %v1876, %v2244
        %s2257 = sld [smem:[#allocation9]]
        %v2258 = vstv %s2257
        %v2259 = vadd.f32 %v2245, %v2258
        %v2260 = vadd.f32 %v2246, %v2258
        %v2261 = vadd.f32 %v2247, %v2258
        %v2262 = vadd.f32 %v2248, %v2258
        %v2263 = vadd.f32 %v2249, %v2258
        %v2264 = vadd.f32 %v2250, %v2258
        %v2265 = vadd.f32 %v2251, %v2258
        %v2266 = vadd.f32 %v2252, %v2258
        %v2267 = vadd.f32 %v2253, %v2258
        %v2268 = vadd.f32 %v2254, %v2258
        %v2269 = vadd.f32 %v2255, %v2258
        %v2270 = vadd.f32 %v2256, %v2258
        %v2271 = vmax.f32 %v2259, 0.0
        %v2272 = vmax.f32 %v2260, 0.0
        %v2273 = vmax.f32 %v2261, 0.0
        %v2274 = vmax.f32 %v2262, 0.0
        %v2275 = vmax.f32 %v2263, 0.0
        %v2276 = vmax.f32 %v2264, 0.0
        %v2277 = vmax.f32 %v2265, 0.0
        %v2278 = vmax.f32 %v2266, 0.0
        %v2279 = vmax.f32 %v2267, 0.0
        %v2280 = vmax.f32 %v2268, 0.0
        %v2281 = vmax.f32 %v2269, 0.0
        %v2282 = vmax.f32 %v2270, 0.0
        %v2283 = vstv %s2242
        %v2284 = vmul.f32 %v2271, %v2283
        %v2285 = vmul.f32 %v2272, %v2283
        %v2286 = vmul.f32 %v2273, %v2283
        %v2287 = vmul.f32 %v2274, %v2283
        %v2288 = vmul.f32 %v2275, %v2283
        %v2289 = vmul.f32 %v2276, %v2283
        %v2290 = vmul.f32 %v2277, %v2283
        %v2291 = vmul.f32 %v2278, %v2283
        %v2292 = vmul.f32 %v2279, %v2283
        %v2293 = vmul.f32 %v2280, %v2283
        %v2294 = vmul.f32 %v2281, %v2283
        %v2295 = vmul.f32 %v2282, %v2283
        %2308 = vrot.lane.b32.xlu0 %v2284, 127
        %v2309 = vpop.permute.xlu0 %2308
        %2310 = vrot.lane.b32.xlu0 %v2285, 127
        %v2311 = vpop.permute.xlu0 %2310
        %2312 = vrot.lane.b32.xlu0 %v2286, 127
        %v2313 = vpop.permute.xlu0 %2312
        %2314 = vrot.lane.b32.xlu0 %v2287, 127
        %v2315 = vpop.permute.xlu0 %2314
        %2316 = vrot.lane.b32.xlu0 %v2288, 127
        %v2317 = vpop.permute.xlu0 %2316
        %2318 = vrot.lane.b32.xlu0 %v2289, 127
        %v2319 = vpop.permute.xlu0 %2318
        %2320 = vrot.lane.b32.xlu0 %v2290, 127
        %v2321 = vpop.permute.xlu0 %2320
        %2322 = vrot.lane.b32.xlu0 %v2291, 127
        %v2323 = vpop.permute.xlu0 %2322
        %2324 = vrot.lane.b32.xlu0 %v2292, 127
        %v2325 = vpop.permute.xlu0 %2324
        %2326 = vrot.lane.b32.xlu0 %v2293, 127
        %v2327 = vpop.permute.xlu0 %2326
        %2328 = vrot.lane.b32.xlu0 %v2294, 127
        %v2329 = vpop.permute.xlu0 %2328
        %2330 = vrot.lane.b32.xlu0 %v2295, 127
        %v2331 = vpop.permute.xlu0 %2330
        %v2332 = vsel %vm372, %v2309, %v2311
        %v2333 = vsel %vm372, %v2313, %v2315
        %v2334 = vsel %vm372, %v2317, %v2319
        %v2335 = vsel %vm372, %v2321, %v2323
        %v2336 = vsel %vm372, %v2325, %v2327
        %v2337 = vsel %vm372, %v2329, %v2331
        %2344 = vst [vmem:[%s244 - $0x1] sm:$0xfe] %v2332
        %2345 = vst [vmem:[%s244 + $0x7] sm:$0xff] %v2333
        %2346 = vst [vmem:[%s244 + $0xf] sm:$0x1] %v2334
        %2347 = vst [vmem:[%s244 + $0x5f] sm:$0xfe] %v2335
        %2348 = vst [vmem:[%s244 + $0x67] sm:$0xff] %v2336
        %2349 = vst [vmem:[%s244 + $0x6f] sm:$0x1] %v2337
        %s2350 = sld [smem:[#allocation8 + $0x1]]
        %v2351 = vstv %s2350
        %v2352 = vmul.f32 %v1400, %v2351
        %v2353 = vmul.f32 %v1401, %v2351
        %v2354 = vmul.f32 %v1402, %v2351
        %v2355 = vmul.f32 %v1403, %v2351
        %v2356 = vmul.f32 %v1404, %v2351
        %v2357 = vmul.f32 %v1405, %v2351
        %v2358 = vmul.f32 %v1406, %v2351
        %v2359 = vmul.f32 %v1407, %v2351
        %v2360 = vmul.f32 %v1408, %v2351
        %v2361 = vmul.f32 %v1409, %v2351
        %v2362 = vmul.f32 %v1410, %v2351
        %v2363 = vmul.f32 %v1411, %v2351
        %s2364 = sld [smem:[#allocation9 + $0x1]]
        %v2365 = vstv %s2364
        %v2366 = vadd.f32 %v2352, %v2365
        %v2367 = vadd.f32 %v2353, %v2365
        %v2368 = vadd.f32 %v2354, %v2365
        %v2369 = vadd.f32 %v2355, %v2365
        %v2370 = vadd.f32 %v2356, %v2365
        %v2371 = vadd.f32 %v2357, %v2365
        %v2372 = vadd.f32 %v2358, %v2365
        %v2373 = vadd.f32 %v2359, %v2365
        %v2374 = vadd.f32 %v2360, %v2365
        %v2375 = vadd.f32 %v2361, %v2365
        %v2376 = vadd.f32 %v2362, %v2365
        %v2377 = vadd.f32 %v2363, %v2365
        %v2378 = vmax.f32 %v2366, 0.0
        %v2379 = vmax.f32 %v2367, 0.0
        %v2380 = vmax.f32 %v2368, 0.0
        %v2381 = vmax.f32 %v2369, 0.0
        %v2382 = vmax.f32 %v2370, 0.0
        %v2383 = vmax.f32 %v2371, 0.0
        %v2384 = vmax.f32 %v2372, 0.0
        %v2385 = vmax.f32 %v2373, 0.0
        %v2386 = vmax.f32 %v2374, 0.0
        %v2387 = vmax.f32 %v2375, 0.0
        %v2388 = vmax.f32 %v2376, 0.0
        %v2389 = vmax.f32 %v2377, 0.0
        %v2390 = vmul.f32 %v2378, %v2283
        %v2391 = vmul.f32 %v2379, %v2283
        %v2392 = vmul.f32 %v2380, %v2283
        %v2393 = vmul.f32 %v2381, %v2283
        %v2394 = vmul.f32 %v2382, %v2283
        %v2395 = vmul.f32 %v2383, %v2283
        %v2396 = vmul.f32 %v2384, %v2283
        %v2397 = vmul.f32 %v2385, %v2283
        %v2398 = vmul.f32 %v2386, %v2283
        %v2399 = vmul.f32 %v2387, %v2283
        %v2400 = vmul.f32 %v2388, %v2283
        %v2401 = vmul.f32 %v2389, %v2283
        %2414 = vrot.lane.b32.xlu0 %v2390, 127
        %v2415 = vpop.permute.xlu0 %2414
        %2416 = vrot.lane.b32.xlu0 %v2391, 127
        %v2417 = vpop.permute.xlu0 %2416
        %2418 = vrot.lane.b32.xlu0 %v2392, 127
        %v2419 = vpop.permute.xlu0 %2418
        %2420 = vrot.lane.b32.xlu0 %v2393, 127
        %v2421 = vpop.permute.xlu0 %2420
        %2422 = vrot.lane.b32.xlu0 %v2394, 127
        %v2423 = vpop.permute.xlu0 %2422
        %2424 = vrot.lane.b32.xlu0 %v2395, 127
        %v2425 = vpop.permute.xlu0 %2424
        %2426 = vrot.lane.b32.xlu0 %v2396, 127
        %v2427 = vpop.permute.xlu0 %2426
        %2428 = vrot.lane.b32.xlu0 %v2397, 127
        %v2429 = vpop.permute.xlu0 %2428
        %2430 = vrot.lane.b32.xlu0 %v2398, 127
        %v2431 = vpop.permute.xlu0 %2430
        %2432 = vrot.lane.b32.xlu0 %v2399, 127
        %v2433 = vpop.permute.xlu0 %2432
        %2434 = vrot.lane.b32.xlu0 %v2400, 127
        %v2435 = vpop.permute.xlu0 %2434
        %2436 = vrot.lane.b32.xlu0 %v2401, 127
        %v2437 = vpop.permute.xlu0 %2436
        %v2438 = vsel %vm372, %v2415, %v2417
        %v2439 = vsel %vm372, %v2419, %v2421
        %v2440 = vsel %vm372, %v2423, %v2425
        %v2441 = vsel %vm372, %v2427, %v2429
        %v2442 = vsel %vm372, %v2431, %v2433
        %v2443 = vsel %vm372, %v2435, %v2437
        %s2450 = scalar_lea.vmem %s244, 16 [#allocation11]
        %2451 = vst [vmem:[%s2450 - $0x2] sm:$0xfc] %v2438
        %2452 = vst [vmem:[%s2450 + $0x6] sm:$0xff] %v2439
        %2453 = vst [vmem:[%s2450 + $0xe] sm:$0x3] %v2440
        %2454 = vst [vmem:[%s2450 + $0x5e] sm:$0xfc] %v2441
        %2455 = vst [vmem:[%s2450 + $0x66] sm:$0xff] %v2442
        %2456 = vst [vmem:[%s2450 + $0x6e] sm:$0x3] %v2443
        %s2457 = sld [smem:[#allocation8 + $0x2]]
        %v2458 = vstv %s2457
        %v2459 = vmul.f32 %v1747, %v2458
        %v2460 = vmul.f32 %v1748, %v2458
        %v2461 = vmul.f32 %v1749, %v2458
        %v2462 = vmul.f32 %v1750, %v2458
        %v2463 = vmul.f32 %v1751, %v2458
        %v2464 = vmul.f32 %v1752, %v2458
        %v2465 = vmul.f32 %v1753, %v2458
        %v2466 = vmul.f32 %v1754, %v2458
        %v2467 = vmul.f32 %v1755, %v2458
        %v2468 = vmul.f32 %v1756, %v2458
        %v2469 = vmul.f32 %v1757, %v2458
        %v2470 = vmul.f32 %v1758, %v2458
        %s2471 = sld [smem:[#allocation9 + $0x2]]
        %v2472 = vstv %s2471
        %v2473 = vadd.f32 %v2459, %v2472
        %v2474 = vadd.f32 %v2460, %v2472
        %v2475 = vadd.f32 %v2461, %v2472
        %v2476 = vadd.f32 %v2462, %v2472
        %v2477 = vadd.f32 %v2463, %v2472
        %v2478 = vadd.f32 %v2464, %v2472
        %v2479 = vadd.f32 %v2465, %v2472
        %v2480 = vadd.f32 %v2466, %v2472
        %v2481 = vadd.f32 %v2467, %v2472
        %v2482 = vadd.f32 %v2468, %v2472
        %v2483 = vadd.f32 %v2469, %v2472
        %v2484 = vadd.f32 %v2470, %v2472
        %v2485 = vmax.f32 %v2473, 0.0
        %v2486 = vmax.f32 %v2474, 0.0
        %v2487 = vmax.f32 %v2475, 0.0
        %v2488 = vmax.f32 %v2476, 0.0
        %v2489 = vmax.f32 %v2477, 0.0
        %v2490 = vmax.f32 %v2478, 0.0
        %v2491 = vmax.f32 %v2479, 0.0
        %v2492 = vmax.f32 %v2480, 0.0
        %v2493 = vmax.f32 %v2481, 0.0
        %v2494 = vmax.f32 %v2482, 0.0
        %v2495 = vmax.f32 %v2483, 0.0
        %v2496 = vmax.f32 %v2484, 0.0
        %v2497 = vmul.f32 %v2485, %v2283
        %v2498 = vmul.f32 %v2486, %v2283
        %v2499 = vmul.f32 %v2487, %v2283
        %v2500 = vmul.f32 %v2488, %v2283
        %v2501 = vmul.f32 %v2489, %v2283
        %v2502 = vmul.f32 %v2490, %v2283
        %v2503 = vmul.f32 %v2491, %v2283
        %v2504 = vmul.f32 %v2492, %v2283
        %v2505 = vmul.f32 %v2493, %v2283
        %v2506 = vmul.f32 %v2494, %v2283
        %v2507 = vmul.f32 %v2495, %v2283
        %v2508 = vmul.f32 %v2496, %v2283
        %2521 = vrot.lane.b32.xlu0 %v2497, 126
        %v2522 = vpop.permute.xlu0 %2521
        %2523 = vrot.lane.b32.xlu0 %v2498, 126
        %v2524 = vpop.permute.xlu0 %2523
        %2525 = vrot.lane.b32.xlu0 %v2499, 126
        %v2526 = vpop.permute.xlu0 %2525
        %2527 = vrot.lane.b32.xlu0 %v2500, 126
        %v2528 = vpop.permute.xlu0 %2527
        %2529 = vrot.lane.b32.xlu0 %v2501, 126
        %v2530 = vpop.permute.xlu0 %2529
        %2531 = vrot.lane.b32.xlu0 %v2502, 126
        %v2532 = vpop.permute.xlu0 %2531
        %2533 = vrot.lane.b32.xlu0 %v2503, 126
        %v2534 = vpop.permute.xlu0 %2533
        %2535 = vrot.lane.b32.xlu0 %v2504, 126
        %v2536 = vpop.permute.xlu0 %2535
        %2537 = vrot.lane.b32.xlu0 %v2505, 126
        %v2538 = vpop.permute.xlu0 %2537
        %2539 = vrot.lane.b32.xlu0 %v2506, 126
        %v2540 = vpop.permute.xlu0 %2539
        %2541 = vrot.lane.b32.xlu0 %v2507, 126
        %v2542 = vpop.permute.xlu0 %2541
        %2543 = vrot.lane.b32.xlu0 %v2508, 126
        %v2544 = vpop.permute.xlu0 %2543
        %v2545 = vsel %vm417, %v2522, %v2524
        %v2546 = vsel %vm417, %v2526, %v2528
        %v2547 = vsel %vm417, %v2530, %v2532
        %v2548 = vsel %vm417, %v2534, %v2536
        %v2549 = vsel %vm417, %v2538, %v2540
        %v2550 = vsel %vm417, %v2542, %v2544
        %s2557 = scalar_lea.vmem %s244, 32 [#allocation11]
        %2558 = vst [vmem:[%s2557 - $0x1] sm:$0xfe] %v2545
        %2559 = vst [vmem:[%s2557 + $0x7] sm:$0xff] %v2546
        %2560 = vst [vmem:[%s2557 + $0xf] sm:$0x1] %v2547
        %2561 = vst [vmem:[%s2557 + $0x5f] sm:$0xfe] %v2548
        %2562 = vst [vmem:[%s2557 + $0x67] sm:$0xff] %v2549
        %2563 = vst [vmem:[%s2557 + $0x6f] sm:$0x1] %v2550
        %s2564 = sld [smem:[#allocation8 + $0x3]]
        %v2565 = vstv %s2564
        %v2566 = vmul.f32 %v1919, %v2565
        %v2567 = vmul.f32 %v1920, %v2565
        %v2568 = vmul.f32 %v1921, %v2565
        %v2569 = vmul.f32 %v1922, %v2565
        %v2570 = vmul.f32 %v1923, %v2565
        %v2571 = vmul.f32 %v1924, %v2565
        %v2572 = vmul.f32 %v1925, %v2565
        %v2573 = vmul.f32 %v1926, %v2565
        %v2574 = vmul.f32 %v1927, %v2565
        %v2575 = vmul.f32 %v1928, %v2565
        %v2576 = vmul.f32 %v1929, %v2565
        %v2577 = vmul.f32 %v1930, %v2565
        %s2578 = sld [smem:[#allocation9 + $0x3]]
        %v2579 = vstv %s2578
        %v2580 = vadd.f32 %v2566, %v2579
        %v2581 = vadd.f32 %v2567, %v2579
        %v2582 = vadd.f32 %v2568, %v2579
        %v2583 = vadd.f32 %v2569, %v2579
        %v2584 = vadd.f32 %v2570, %v2579
        %v2585 = vadd.f32 %v2571, %v2579
        %v2586 = vadd.f32 %v2572, %v2579
        %v2587 = vadd.f32 %v2573, %v2579
        %v2588 = vadd.f32 %v2574, %v2579
        %v2589 = vadd.f32 %v2575, %v2579
        %v2590 = vadd.f32 %v2576, %v2579
        %v2591 = vadd.f32 %v2577, %v2579
        %v2592 = vmax.f32 %v2580, 0.0
        %v2593 = vmax.f32 %v2581, 0.0
        %v2594 = vmax.f32 %v2582, 0.0
        %v2595 = vmax.f32 %v2583, 0.0
        %v2596 = vmax.f32 %v2584, 0.0
        %v2597 = vmax.f32 %v2585, 0.0
        %v2598 = vmax.f32 %v2586, 0.0
        %v2599 = vmax.f32 %v2587, 0.0
        %v2600 = vmax.f32 %v2588, 0.0
        %v2601 = vmax.f32 %v2589, 0.0
        %v2602 = vmax.f32 %v2590, 0.0
        %v2603 = vmax.f32 %v2591, 0.0
        %v2604 = vmul.f32 %v2592, %v2283
        %v2605 = vmul.f32 %v2593, %v2283
        %v2606 = vmul.f32 %v2594, %v2283
        %v2607 = vmul.f32 %v2595, %v2283
        %v2608 = vmul.f32 %v2596, %v2283
        %v2609 = vmul.f32 %v2597, %v2283
        %v2610 = vmul.f32 %v2598, %v2283
        %v2611 = vmul.f32 %v2599, %v2283
        %v2612 = vmul.f32 %v2600, %v2283
        %v2613 = vmul.f32 %v2601, %v2283
        %v2614 = vmul.f32 %v2602, %v2283
        %v2615 = vmul.f32 %v2603, %v2283
        %2628 = vrot.lane.b32.xlu0 %v2604, 127
        %v2629 = vpop.permute.xlu0 %2628
        %2630 = vrot.lane.b32.xlu0 %v2605, 127
        %v2631 = vpop.permute.xlu0 %2630
        %2632 = vrot.lane.b32.xlu0 %v2606, 127
        %v2633 = vpop.permute.xlu0 %2632
        %2634 = vrot.lane.b32.xlu0 %v2607, 127
        %v2635 = vpop.permute.xlu0 %2634
        %2636 = vrot.lane.b32.xlu0 %v2608, 127
        %v2637 = vpop.permute.xlu0 %2636
        %2638 = vrot.lane.b32.xlu0 %v2609, 127
        %v2639 = vpop.permute.xlu0 %2638
        %2640 = vrot.lane.b32.xlu0 %v2610, 127
        %v2641 = vpop.permute.xlu0 %2640
        %2642 = vrot.lane.b32.xlu0 %v2611, 127
        %v2643 = vpop.permute.xlu0 %2642
        %2644 = vrot.lane.b32.xlu0 %v2612, 127
        %v2645 = vpop.permute.xlu0 %2644
        %2646 = vrot.lane.b32.xlu0 %v2613, 127
        %v2647 = vpop.permute.xlu0 %2646
        %2648 = vrot.lane.b32.xlu0 %v2614, 127
        %v2649 = vpop.permute.xlu0 %2648
        %2650 = vrot.lane.b32.xlu0 %v2615, 127
        %v2651 = vpop.permute.xlu0 %2650
        %v2652 = vsel %vm372, %v2629, %v2631
        %v2653 = vsel %vm372, %v2633, %v2635
        %v2654 = vsel %vm372, %v2637, %v2639
        %v2655 = vsel %vm372, %v2641, %v2643
        %v2656 = vsel %vm372, %v2645, %v2647
        %v2657 = vsel %vm372, %v2649, %v2651
        %s2664 = scalar_lea.vmem %s244, 48 [#allocation11]
        %2665 = vst [vmem:[%s2664 - $0x1] sm:$0xfe] %v2652
        %2666 = vst [vmem:[%s2664 + $0x7] sm:$0xff] %v2653
        %2667 = vst [vmem:[%s2664 + $0xf] sm:$0x1] %v2654
        %2668 = vst [vmem:[%s2664 + $0x5f] sm:$0xfe] %v2655
        %2669 = vst [vmem:[%s2664 + $0x67] sm:$0xff] %v2656
        %2670 = vst [vmem:[%s2664 + $0x6f] sm:$0x1] %v2657
        %s2671 = sld [smem:[#allocation8 + $0x4]]
        %v2672 = vstv %s2671
        %v2673 = vmul.f32 %v2238, %v2672
        %v2674 = vmul.f32 %v2239, %v2672
        %v2675 = vmul.f32 %v2240, %v2672
        %v2676 = vmul.f32 %v2241, %v2672
        %s2677 = sld [smem:[#allocation9 + $0x4]]
        %v2678 = vstv %s2677
        %v2679 = vadd.f32 %v2673, %v2678
        %v2680 = vadd.f32 %v2674, %v2678
        %v2681 = vadd.f32 %v2675, %v2678
        %v2682 = vadd.f32 %v2676, %v2678
        %v2683 = vmax.f32 %v2679, 0.0
        %v2684 = vmax.f32 %v2680, 0.0
        %v2685 = vmax.f32 %v2681, 0.0
        %v2686 = vmax.f32 %v2682, 0.0
        %v2687 = vmul.f32 %v2683, %v2283
        %v2688 = vmul.f32 %v2684, %v2283
        %v2689 = vmul.f32 %v2685, %v2283
        %v2690 = vmul.f32 %v2686, %v2283
        %s2691 = scalar_lea.vmem %s244, 64 [#allocation11]
        %2692 = vst [vmem:[%s2691] sm:$0xff] %v2687
        %2693 = vst [vmem:[%s2691 + $0x8] sm:$0xff] %v2688
        %2694 = vst [vmem:[%s2691 + $0x60] sm:$0xff] %v2689
        %2695 = vst [vmem:[%s2691 + $0x68] sm:$0xff] %v2690
        %s2696 = sld [smem:[#allocation8 + $0x5]]
        %v2697 = vstv %s2696
        %v2698 = vmul.f32 %v1865, %v2697
        %v2699 = vmul.f32 %v1866, %v2697
        %v2700 = vmul.f32 %v1867, %v2697
        %v2701 = vmul.f32 %v1868, %v2697
        %v2702 = vmul.f32 %v1869, %v2697
        %v2703 = vmul.f32 %v1870, %v2697
        %v2704 = vmul.f32 %v1871, %v2697
        %v2705 = vmul.f32 %v1872, %v2697
        %v2706 = vmul.f32 %v1873, %v2697
        %v2707 = vmul.f32 %v1874, %v2697
        %v2708 = vmul.f32 %v1875, %v2697
        %v2709 = vmul.f32 %v1876, %v2697
        %s2710 = sld [smem:[#allocation9 + $0x5]]
        %v2711 = vstv %s2710
        %v2712 = vadd.f32 %v2698, %v2711
        %v2713 = vadd.f32 %v2699, %v2711
        %v2714 = vadd.f32 %v2700, %v2711
        %v2715 = vadd.f32 %v2701, %v2711
        %v2716 = vadd.f32 %v2702, %v2711
        %v2717 = vadd.f32 %v2703, %v2711
        %v2718 = vadd.f32 %v2704, %v2711
        %v2719 = vadd.f32 %v2705, %v2711
        %v2720 = vadd.f32 %v2706, %v2711
        %v2721 = vadd.f32 %v2707, %v2711
        %v2722 = vadd.f32 %v2708, %v2711
        %v2723 = vadd.f32 %v2709, %v2711
        %v2724 = vmax.f32 %v2712, 0.0
        %v2725 = vmax.f32 %v2713, 0.0
        %v2726 = vmax.f32 %v2714, 0.0
        %v2727 = vmax.f32 %v2715, 0.0
        %v2728 = vmax.f32 %v2716, 0.0
        %v2729 = vmax.f32 %v2717, 0.0
        %v2730 = vmax.f32 %v2718, 0.0
        %v2731 = vmax.f32 %v2719, 0.0
        %v2732 = vmax.f32 %v2720, 0.0
        %v2733 = vmax.f32 %v2721, 0.0
        %v2734 = vmax.f32 %v2722, 0.0
        %v2735 = vmax.f32 %v2723, 0.0
        %v2736 = vmul.f32 %v2724, %v2283
        %v2737 = vmul.f32 %v2725, %v2283
        %v2738 = vmul.f32 %v2726, %v2283
        %v2739 = vmul.f32 %v2727, %v2283
        %v2740 = vmul.f32 %v2728, %v2283
        %v2741 = vmul.f32 %v2729, %v2283
        %v2742 = vmul.f32 %v2730, %v2283
        %v2743 = vmul.f32 %v2731, %v2283
        %v2744 = vmul.f32 %v2732, %v2283
        %v2745 = vmul.f32 %v2733, %v2283
        %v2746 = vmul.f32 %v2734, %v2283
        %v2747 = vmul.f32 %v2735, %v2283
        %2760 = vrot.lane.b32.xlu0 %v2736, 127
        %v2761 = vpop.permute.xlu0 %2760
        %2762 = vrot.lane.b32.xlu0 %v2737, 127
        %v2763 = vpop.permute.xlu0 %2762
        %2764 = vrot.lane.b32.xlu0 %v2738, 127
        %v2765 = vpop.permute.xlu0 %2764
        %2766 = vrot.lane.b32.xlu0 %v2739, 127
        %v2767 = vpop.permute.xlu0 %2766
        %2768 = vrot.lane.b32.xlu0 %v2740, 127
        %v2769 = vpop.permute.xlu0 %2768
        %2770 = vrot.lane.b32.xlu0 %v2741, 127
        %v2771 = vpop.permute.xlu0 %2770
        %2772 = vrot.lane.b32.xlu0 %v2742, 127
        %v2773 = vpop.permute.xlu0 %2772
        %2774 = vrot.lane.b32.xlu0 %v2743, 127
        %v2775 = vpop.permute.xlu0 %2774
        %2776 = vrot.lane.b32.xlu0 %v2744, 127
        %v2777 = vpop.permute.xlu0 %2776
        %2778 = vrot.lane.b32.xlu0 %v2745, 127
        %v2779 = vpop.permute.xlu0 %2778
        %2780 = vrot.lane.b32.xlu0 %v2746, 127
        %v2781 = vpop.permute.xlu0 %2780
        %2782 = vrot.lane.b32.xlu0 %v2747, 127
        %v2783 = vpop.permute.xlu0 %2782
        %v2784 = vsel %vm372, %v2761, %v2763
        %v2785 = vsel %vm372, %v2765, %v2767
        %v2786 = vsel %vm372, %v2769, %v2771
        %v2787 = vsel %vm372, %v2773, %v2775
        %v2788 = vsel %vm372, %v2777, %v2779
        %v2789 = vsel %vm372, %v2781, %v2783
        %s2796 = scalar_lea.vmem %s244, 80 [#allocation11]
        %2797 = vst [vmem:[%s2796 - $0x1] sm:$0xfe] %v2784
        %2798 = vst [vmem:[%s2796 + $0x7] sm:$0xff] %v2785
        %2799 = vst [vmem:[%s2796 + $0xf] sm:$0x1] %v2786
        %2800 = vst [vmem:[%s2796 + $0x5f] sm:$0xfe] %v2787
        %2801 = vst [vmem:[%s2796 + $0x67] sm:$0xff] %v2788
        %2802 = vst [vmem:[%s2796 + $0x6f] sm:$0x1] %v2789
        %s2803 = sand.u32 %s121, 1
        %s2804 = scalar_lea.sflag [#allocation6], %s2803
        %s2805 = sand.u32 %s121, 1
        %s2806 = smul.addr %s2805, 192
        %s2807 = scalar_lea.vmem [#allocation11], %s2806
        // Predicated region
        $region49: #{tpu_custom_call.1} parent=35 // pred_check
          %p2808 = pneg %p131
        $region50: #{tpu_custom_call.1} parent=35 // pred_check_branch
          %2810 = sbr.rel (%p2808) target = $region52
        $region51: #{tpu_custom_call.1} parent=35 // pred_region
          %s2811 = smul.u32 2, %s24
          %s2813 = ssub.s32 3072, 3072
          %2814 = vsyncadd %s2804, %s2813
          %s2815 = smul.addr %s2811, 12
          %s2816 = smul.addr %s2815, 128
          %s2817 = scalar_lea.hbm %s4, %s2816
          %s2818 = sshll.u32 %s2807, 4
          %s2819 = int_to_ptr.vmem [resolvable:$true] %s2818
          %2824 = dma.vmem_to_hbm [thread:$0]  %s2819, 3072, %s2817, %s2804, 128, 128, 8
        $region52: #{tpu_custom_call.1} parent=35 // pred_fallthru
          _
      $region36: #{tpu_custom_call.1} parent=5 // pred_fallthru
        _
      %p2825 = scmp.le.s32.totalorder 2, %s19
      // Predicated region
      $region53: #{tpu_custom_call.1} parent=5 // pred_check
        %p2826 = pneg %p2825
      $region54: #{tpu_custom_call.1} parent=5 // pred_check_branch
        %2828 = sbr.rel (%p2826) target = $region56
      $region55: #{tpu_custom_call.1} parent=5 // pred_region
        %s2829 = ssub.s32 %s19, 2
        // Predicated region
        $region57: #{tpu_custom_call.1} parent=55 // pred_check
          %p2830 = pneg %p137
        $region58: #{tpu_custom_call.1} parent=55 // pred_check_branch
          %2832 = sbr.rel (%p2830) target = $region60
        $region59: #{tpu_custom_call.1} parent=55 // pred_region
          %s2833 = sand.u32 %s122, 1
          %s2834 = scalar_lea.sflag [#allocation6], %s2833
          %s2835 = sand.u32 %s122, 1
          %s2836 = smul.addr %s2835, 192
          %s2837 = scalar_lea.vmem [#allocation11], %s2836
          %2838 = dma.done %s2834, 3072
        $region60: #{tpu_custom_call.1} parent=55 // pred_fallthru
          _
      $region56: #{tpu_custom_call.1} parent=5 // pred_fallthru
        _
    $region6: #{tpu_custom_call.1} parent=1 // loop_footer
      %s23 = sadd.s32 1, %s19
    $region7: #{tpu_custom_call.1} parent=1 // loop_footer_branch
      %18 = sbr.rel target = $region3
    $region8: #{tpu_custom_call.1} parent=1 // loop_exit
      _
    %2839 = vsyncpa [#allocation5], 1
    %s2840 = scalar_lea.sflag [#allocation5], 1
    %2841 = vsyncpa %s2840, 1
    %2842 = vsyncpa [#allocation6], 1
    %s2843 = scalar_lea.sflag [#allocation6], 1
    %2844 = vsyncpa %s2843, 1
    %2845 = vsyncpa [#allocation7], 1
    %s2846 = scalar_lea.sflag [#allocation7], 1
    %2847 = vsyncpa %s2846, 1
    %2848 = vsyncpa [#allocation10], 1

</llo_original>
